<compile_context>
chip_gen: v6e
topology: v6e:2x2x1
jax: 0.10.0
libtpu: 0.0.40
codegen_flags: <defaults>
</compile_context>

<pallas_src>
import functools
import math

import jax
import jax.numpy as jnp
from jax import lax
from jax.experimental import pallas as pl
from jax.experimental.pallas import tpu as pltpu


# ----------------------- host-side weight preprocessing -----------------------

def _weight_norm(v, g):
    """PyTorch weight_norm (dim=0): W = g * v / ||v||, norm over dims (1,2,3)."""
    n = jnp.sqrt(jnp.sum(v * v, axis=(1, 2, 3), keepdims=True))
    return v * (g.reshape(-1, 1, 1, 1) / n)


def _banded_conv_matrix(w, width):
    """Pack a conv filter (Cout, Csrc, kh, kw) into a block-Toeplitz matrix.

    Returns M of shape (kh * width * Csrc, width * Cout) such that, for an
    input laid out lane-dense as (w_in * Csrc + ci) and an im2col patch over
    the kh vertical taps, `patch @ M` equals the 'same'-padded 2-D conv with
    output lanes (w_out * Cout + co).  Zero-padding along W is encoded in the
    band structure.
    """
    Cout, Csrc, kh, kw = w.shape
    pw = kw // 2
    # S[kx, w_in, w_out] = 1 iff w_in == w_out + kx - pw
    S = jnp.stack([jnp.eye(width, k=pw - kx, dtype=jnp.float32) for kx in range(kw)])
    wt = jnp.transpose(w, (2, 3, 1, 0)).astype(jnp.float32)      # (kh, kw, Csrc, Cout)
    M = jnp.einsum("xab,yxio->yaibo", S, wt)                     # (kh, Win, Csrc, Wout, Cout)
    return M.reshape(kh * width * Csrc, width * Cout)


def _pick_time_block(T, want, per_t_bytes, budget_bytes):
    """Divisor of T that is >= `want` when possible, within a VMEM block budget."""
    divs = [d for d in range(1, T + 1) if T % d == 0]
    cap = max(1, budget_bytes // max(per_t_bytes, 1))
    fit = [d for d in divs if d <= cap] or [1]
    geq = [d for d in fit if d >= want]
    return min(geq) if geq else max(fit)


# ----------------------------- Pallas kernels ---------------------------------

def _xgate_kernel(x_ref, wx_ref, bx_ref, out_ref, *, Tb, B, H, WCin, kh, WC3):
    """Per-frame-block x-side gate pre-activations: conv(x, Wx[r|z|h]) + bias.

    x block   : (Tb, B, H + kh - 1, W*Cin_pad)   (H pre-padded on the host)
    out block : (Tb, B, H, 3*W*Cout)             (lane-dense, gates [r | z | h])
    The kh vertical taps are fused into a single K-dense matmul (im2col concat),
    with M = Tb*B*H rows so the MXU M dimension is filled.
    """
    xp = x_ref[...]                                      # (Tb, B, Hp, WCin)
    patch = jnp.concatenate([xp[:, :, ky:ky + H, :] for ky in range(kh)],
                            axis=-1)                     # (Tb, B, H, kh*WCin)
    patch = patch.reshape(Tb * B * H, kh * WCin)
    acc = jnp.dot(patch, wx_ref[...], preferred_element_type=jnp.float32)
    out_ref[...] = (acc + bx_ref[...]).reshape(Tb, B, H, WC3)


def _gru_kernel(gx_ref, h0_ref, whrz_ref, whh_ref, brz_ref, bh_ref,
                out_ref, h_scr, *, Tc, B, H, WC, kh, ph):
    """Sequential GRU recurrence.

    Time is iterated with an in-kernel fori_loop over a Tc-sized chunk (the gx
    chunk and the output chunk are resident in VMEM), so there is no per-step
    grid/pipeline overhead.  The hidden state is carried as a loop value and
    persisted across chunks in the h_scr VMEM scratch.
    """
    @pl.when(pl.program_id(0) == 0)
    def _():
        h_scr[...] = jnp.broadcast_to(h0_ref[...][None], (B, H, WC))

    # Hoist weights / biases out of the time loop (loaded once per chunk).
    whrz = whrz_ref[...]                                 # (kh*WC, 2*WC)
    whh = whh_ref[...]                                   # (kh*WC,   WC)
    brz = brz_ref[...]                                   # (1, 2*WC)
    bh = bh_ref[...]                                     # (1,   WC)

    def make_patch(hval):
        # im2col of the kh vertical taps, built as a value (no scratch
        # write-then-read round trip): zero-pad along H, take shifted slices,
        # concat along the (128-aligned) lane axis.
        if ph > 0:
            zrow = jnp.zeros((B, ph, WC), jnp.float32)
            hp = jnp.concatenate([zrow, hval, zrow], axis=1)   # (B, H+2ph, WC)
        else:
            hp = hval
        taps = [hp[:, ky:ky + H, :] for ky in range(kh)]
        patch = taps[0] if kh == 1 else jnp.concatenate(taps, axis=-1)
        return patch.reshape(B * H, kh * WC)

    def step(t, hidden):
        gx = gx_ref[t]                                   # (B, H, 3*WC), [r|z|h]

        # reset / update gates: Whr|Whz fused into one matmul (N = 2*W*Cout)
        rz = (jnp.dot(make_patch(hidden), whrz,
                      preferred_element_type=jnp.float32) + brz
              ).reshape(B, H, 2 * WC)
        r = jax.nn.sigmoid(gx[:, :, 0:WC] + rz[:, :, 0:WC])
        z = jax.nn.sigmoid(gx[:, :, WC:2 * WC] + rz[:, :, WC:2 * WC])

        # candidate uses conv over (reset * hidden)
        hh = (jnp.dot(make_patch(r * hidden), whh,
                      preferred_element_type=jnp.float32) + bh
              ).reshape(B, H, WC)
        h_hat = jnp.tanh(gx[:, :, 2 * WC:3 * WC] + hh)

        new_h = hidden * z + h_hat * (1.0 - z)
        out_ref[t] = new_h
        return new_h

    h_final = lax.fori_loop(0, Tc, step, h_scr[...], unroll=(Tc <= 8))
    h_scr[...] = h_final


# --------------------------------- wrapper ------------------------------------

def conv_gru_wnorm_forward(X, params, in_kernel, out_kernel):
    """X: (T, B, Cin, H, W) float32, PyTorch layout. Returns (T, B, Cout, H, W)."""
    T, B, Cin, H, W = X.shape
    Cout = params["Wxr_v"].shape[0]
    kh_i = in_kernel[0]
    kh_o = out_kernel[0]
    ph_i, ph_o = kh_i // 2, kh_o // 2
    WC = W * Cout

    # lane-pad Cin so W*Cin_pad is a multiple of 128 (unmasked loads, K-dense MXU)
    q = 128 // math.gcd(W, 128)
    Cin_pad = ((Cin + q - 1) // q) * q
    WCin = W * Cin_pad

    # weight-norm reparameterisation (data independent -> done once on host)
    def wn(name):
        return _weight_norm(params[name + "_v"].astype(jnp.float32),
                            params[name + "_g"].astype(jnp.float32))

    def pad_cin(w):
        return jnp.pad(w, ((0, 0), (0, Cin_pad - Cin), (0, 0), (0, 0)))

    Wxr, Wxz, Wxh = pad_cin(wn("Wxr")), pad_cin(wn("Wxz")), pad_cin(wn("Wxh"))
    Whr, Whz, Whh = wn("Whr"), wn("Whz"), wn("Whh")

    # fused banded conv matrices (gate fusion: x-path N=3*WC, hidden r|z N=2*WC)
    wx_mat = jnp.concatenate([_banded_conv_matrix(Wxr, W),
                              _banded_conv_matrix(Wxz, W),
                              _banded_conv_matrix(Wxh, W)], axis=1)    # (kh_i*WCin, 3*WC)
    whrz_mat = jnp.concatenate([_banded_conv_matrix(Whr, W),
                                _banded_conv_matrix(Whz, W)], axis=1)  # (kh_o*WC, 2*WC)
    whh_mat = _banded_conv_matrix(Whh, W)                              # (kh_o*WC, WC)

    # biases, tiled over W to match the (w*Cout + co) lane layout
    bx_vec = jnp.concatenate([jnp.tile(params["bxr"], W),
                              jnp.tile(params["bxz"], W),
                              jnp.tile(params["bxh"], W)]).astype(jnp.float32)[None]
    bhrz_vec = jnp.concatenate([jnp.tile(params["bhr"], W),
                                jnp.tile(params["bhz"], W)]).astype(jnp.float32)[None]
    bhh_vec = jnp.tile(params["bhh"], W).astype(jnp.float32)[None]

    # lane-dense layouts: merge (W, C) into the last axis; pad H for the conv halo
    x_l = jnp.transpose(X, (0, 1, 3, 4, 2)).astype(jnp.float32)        # (T,B,H,W,Cin)
    x_l = jnp.pad(x_l, ((0, 0),) * 4 + ((0, Cin_pad - Cin),)).reshape(T, B, H, WCin)
    x_pad = jnp.pad(x_l, ((0, 0), (0, 0), (ph_i, ph_i), (0, 0)))       # (T,B,H+2ph_i,WCin)
    Hp_i = H + 2 * ph_i
    h0_l = jnp.transpose(params["h0"], (1, 2, 0)).reshape(H, WC).astype(jnp.float32)

    # ---------------- pass 1: x-side gates, parallel over T blocks ------------
    per_t1 = 4 * 2 * (B * Hp_i * WCin + B * H * 3 * WC)      # dbl-buffered in+out
    Tb = _pick_time_block(T, want=max(1, -(-256 // (B * H))),
                          per_t_bytes=per_t1, budget_bytes=16 * 1024 * 1024)

    x_cost = pl.CostEstimate(
        flops=2 * T * (B * H) * (kh_i * WCin) * (3 * WC),
        transcendentals=0,
        bytes_accessed=4 * (x_pad.size + T * B * H * 3 * WC + wx_mat.size))

    gx = pl.pallas_call(
        functools.partial(_xgate_kernel, Tb=Tb, B=B, H=H, WCin=WCin,
                          kh=kh_i, WC3=3 * WC),
        out_shape=jax.ShapeDtypeStruct((T, B, H, 3 * WC), jnp.float32),
        grid_spec=pltpu.PrefetchScalarGridSpec(
            num_scalar_prefetch=0,
            grid=(T // Tb,),
            in_specs=[
                pl.BlockSpec((Tb, B, Hp_i, WCin), lambda i: (i, 0, 0, 0)),
                pl.BlockSpec((kh_i * WCin, 3 * WC), lambda i: (0, 0)),
                pl.BlockSpec((1, 3 * WC), lambda i: (0, 0)),
            ],
            out_specs=pl.BlockSpec((Tb, B, H, 3 * WC), lambda i: (i, 0, 0, 0)),
        ),
        compiler_params=pltpu.CompilerParams(
            dimension_semantics=("parallel",),
            vmem_limit_bytes=48 * 1024 * 1024),
        cost_estimate=x_cost,
    )(x_pad, wx_mat, bx_vec)

    # ---------------- pass 2: sequential GRU recurrence (chunked T) -----------
    per_t2 = 4 * 2 * (B * H * 3 * WC + B * H * WC)           # dbl-buffered gx+out
    Tc = _pick_time_block(T, want=T, per_t_bytes=per_t2,
                          budget_bytes=12 * 1024 * 1024)

    h_cost = pl.CostEstimate(
        flops=2 * T * (B * H) * (kh_o * WC) * (3 * WC),
        transcendentals=3 * T * B * H * WC,
        bytes_accessed=4 * (gx.size + T * B * H * WC + whrz_mat.size + whh_mat.size))

    out = pl.pallas_call(
        functools.partial(_gru_kernel, Tc=Tc, B=B, H=H, WC=WC, kh=kh_o, ph=ph_o),
        out_shape=jax.ShapeDtypeStruct((T, B, H, WC), jnp.float32),
        grid_spec=pltpu.PrefetchScalarGridSpec(
            num_scalar_prefetch=0,
            grid=(T // Tc,),
            in_specs=[
                pl.BlockSpec((Tc, B, H, 3 * WC), lambda c: (c, 0, 0, 0)),  # gx chunk
                pl.BlockSpec((H, WC), lambda c: (0, 0)),                   # h0
                pl.BlockSpec((kh_o * WC, 2 * WC), lambda c: (0, 0)),       # Whr|Whz
                pl.BlockSpec((kh_o * WC, WC), lambda c: (0, 0)),           # Whh
                pl.BlockSpec((1, 2 * WC), lambda c: (0, 0)),               # bhr|bhz
                pl.BlockSpec((1, WC), lambda c: (0, 0)),                   # bhh
            ],
            out_specs=pl.BlockSpec((Tc, B, H, WC), lambda c: (c, 0, 0, 0)),
            scratch_shapes=[
                pltpu.VMEM((B, H, WC), jnp.float32),         # hidden carry across chunks
            ],
        ),
        compiler_params=pltpu.CompilerParams(
            dimension_semantics=("arbitrary",),
            vmem_limit_bytes=48 * 1024 * 1024),
        cost_estimate=h_cost,
    )(gx, h0_l, whrz_mat, whh_mat, bhrz_vec, bhh_vec)

    out = out.reshape(T, B, H, W, Cout)
    return jnp.transpose(out, (0, 1, 4, 2, 3))                # (T, B, Cout, H, W)


# ------------------------- pure-JAX reference (NCHW) --------------------------

def _ref_forward(X, params, in_kernel, out_kernel):
    T, B, Cin, H, W = X.shape

    def wn(name):
        return _weight_norm(params[name + "_v"], params[name + "_g"])

    Wxr, Wxz, Wxh = wn("Wxr"), wn("Wxz"), wn("Wxh")
    Whr, Whz, Whh = wn("Whr"), wn("Whz"), wn("Whh")
    Cout = Wxr.shape[0]
    pad_i = (in_kernel[0] // 2, in_kernel[1] // 2)
    pad_o = (out_kernel[0] // 2, out_kernel[1] // 2)
    dn = lax.conv_dimension_numbers(X.shape[1:], Wxr.shape, ("NCHW", "OIHW", "NCHW"))

    def conv(x, w, b, pad):
        y = lax.conv_general_dilated(x, w, (1, 1),
                                     [(pad[0], pad[0]), (pad[1], pad[1])],
                                     dimension_numbers=dn)
        return y + b[None, :, None, None]

    hidden = jnp.broadcast_to(params["h0"][None], (B, Cout, H, W))
    outs = []
    for t in range(T):
        frame = X[t]
        r = jax.nn.sigmoid(conv(frame, Wxr, params["bxr"], pad_i) +
                           conv(hidden, Whr, params["bhr"], pad_o))
        z = jax.nn.sigmoid(conv(frame, Wxz, params["bxz"], pad_i) +
                           conv(hidden, Whz, params["bhz"], pad_o))
        hh = jnp.tanh(conv(frame, Wxh, params["bxh"], pad_i) +
                      conv(r * hidden, Whh, params["bhh"], pad_o))
        hidden = hidden * z + hh * (1.0 - z)
        outs.append(hidden)
    return jnp.stack(outs, 0)


# ----------------------------------- main --------------------------------------

if __name__ == "__main__":
    # module config (small, W*Cout = 128 -> exactly one lane tile)
    T, B = 8, 2
    Cin, Cout = 4, 8
    H = W = 16
    in_kernel = (3, 3)
    out_kernel = (3, 3)

    keys = iter(jax.random.split(jax.random.PRNGKey(0), 32))
    params = {}
    for name, csrc, kshape in [("Wxh", Cin, in_kernel), ("Whh", Cout, out_kernel),
                               ("Wxz", Cin, in_kernel), ("Whz", Cout, out_kernel),
                               ("Wxr", Cin, in_kernel), ("Whr", Cout, out_kernel)]:
        v = 0.01 * jax.random.normal(next(keys), (Cout, csrc, *kshape), jnp.float32)
        # PyTorch initialises g = ||v||; perturb it so the reparam is exercised.
        g = jnp.sqrt(jnp.sum(v * v, axis=(1, 2, 3))) * jax.random.uniform(
            next(keys), (Cout,), minval=0.5, maxval=1.5)
        params[name + "_v"] = v
        params[name + "_g"] = g
    for bname in ["bxh", "bhh", "bxz", "bhz", "bxr", "bhr"]:
        params[bname] = 0.01 * jax.random.normal(next(keys), (Cout,), jnp.float32)
    # h0 = zeros(out_channels, *dims), not learned
    params["h0"] = jnp.zeros((Cout, H, W), jnp.float32)

    X = jax.random.normal(next(keys), (T, B, Cin, H, W), dtype=jnp.float32)

    out = conv_gru_wnorm_forward(X, params, in_kernel, out_kernel)
    out = jax.block_until_ready(out)

    ref = jax.block_until_ready(_ref_forward(X, params, in_kernel, out_kernel))
    assert out.shape == (T, B, Cout, H, W), out.shape
    assert jnp.allclose(out, ref, atol=1e-4, rtol=1e-4), (
        float(jnp.max(jnp.abs(out - ref))))

    print("KERNEL_OK")
</pallas_src>

<mosaic_0001>
module attributes {stable_mosaic.version = 11 : i64} {
  func.func @_xgate_kernel(%arg0: i32, %arg1: memref<8x2x18x128xf32, #tpu.memory_space<vmem>>, %arg2: memref<384x384xf32, #tpu.memory_space<vmem>>, %arg3: memref<1x384xf32, #tpu.memory_space<vmem>>, %arg4: memref<8x2x16x384xf32, #tpu.memory_space<vmem>>) attributes {dimension_semantics = [#tpu.dimension_semantics<parallel>], iteration_bounds = array<i64: 1>, scalar_prefetch = 0 : i64, scratch_operands = 0 : i64, tpu.core_type = #tpu.core_type<tc>, window_params = [{transform_indices = @transform_0, window_bounds = array<i64: 8, 2, 18, 128>}, {pipeline_mode = #tpu.pipeline_mode<synchronous>, transform_indices = @transform_1, window_bounds = array<i64: 384, 384>}, {pipeline_mode = #tpu.pipeline_mode<synchronous>, transform_indices = @transform_2, window_bounds = array<i64: 1, 384>}, {transform_indices = @transform_3, window_bounds = array<i64: 8, 2, 16, 384>}]} {
    %c0 = arith.constant 0 : index
    %c0_0 = arith.constant 0 : index
    %c0_1 = arith.constant 0 : index
    %c0_2 = arith.constant 0 : index
    %0 = vector.load %arg1[%c0, %c0_0, %c0_1, %c0_2] : memref<8x2x18x128xf32, #tpu.memory_space<vmem>>, vector<8x2x18x128xf32>
    %1 = vector.extract_strided_slice %0 {offsets = [0, 0, 0, 0], sizes = [8, 2, 16, 128], strides = [1, 1, 1, 1]} : vector<8x2x18x128xf32> to vector<8x2x16x128xf32>
    %2 = vector.extract_strided_slice %0 {offsets = [0, 0, 1, 0], sizes = [8, 2, 16, 128], strides = [1, 1, 1, 1]} : vector<8x2x18x128xf32> to vector<8x2x16x128xf32>
    %3 = vector.extract_strided_slice %0 {offsets = [0, 0, 2, 0], sizes = [8, 2, 16, 128], strides = [1, 1, 1, 1]} : vector<8x2x18x128xf32> to vector<8x2x16x128xf32>
    %4 = tpu.concatenate %1, %2, %3 in 3 : vector<8x2x16x128xf32>, vector<8x2x16x128xf32>, vector<8x2x16x128xf32> -> vector<8x2x16x384xf32>
    %5 = vector.shape_cast %4 : vector<8x2x16x384xf32> to vector<256x384xf32>
    %c0_3 = arith.constant 0 : index
    %c0_4 = arith.constant 0 : index
    %6 = vector.load %arg2[%c0_3, %c0_4] : memref<384x384xf32, #tpu.memory_space<vmem>>, vector<384x384xf32>
    %cst = arith.constant dense<0.000000e+00> : vector<256x384xf32>
    %7 = tpu.matmul %5, %6, %cst {dimension_numbers = #tpu.dot_dimension_numbers<[1], [0], [0], [1], [0, 0, 1, 1], [], []>} : vector<256x384xf32>, vector<384x384xf32>, vector<256x384xf32> -> vector<256x384xf32>
    %c0_5 = arith.constant 0 : index
    %c0_6 = arith.constant 0 : index
    %8 = vector.load %arg3[%c0_5, %c0_6] : memref<1x384xf32, #tpu.memory_space<vmem>>, vector<1x384xf32>
    %9 = vector.broadcast %8 : vector<1x384xf32> to vector<256x384xf32>
    %10 = arith.addf %7, %9 : vector<256x384xf32>
    %11 = vector.shape_cast %10 : vector<256x384xf32> to vector<8x2x16x384xf32>
    %c0_7 = arith.constant 0 : index
    %c0_8 = arith.constant 0 : index
    %c0_9 = arith.constant 0 : index
    %c0_10 = arith.constant 0 : index
    %12 = vector.load %arg4[%c0_7, %c0_8, %c0_9, %c0_10] : memref<8x2x16x384xf32, #tpu.memory_space<vmem>>, vector<8x2x16x384xf32>
    tpu.vector_store %arg4[%c0_7, %c0_8, %c0_9, %c0_10], %11 {strides = array<i32>} : memref<8x2x16x384xf32, #tpu.memory_space<vmem>>, vector<8x2x16x384xf32>,
    return
  }
  func.func @transform_0(%arg0: i32) -> (i32, i32, i32, i32) {
    %c0_i32 = arith.constant 0 : i32
    %c0_i32_0 = arith.constant 0 : i32
    %c0_i32_1 = arith.constant 0 : i32
    %c0_i32_2 = arith.constant 0 : i32
    return %arg0, %c0_i32, %c0_i32_0, %c0_i32_1 : i32, i32, i32, i32
  }
  func.func @transform_1(%arg0: i32) -> (i32, i32) {
    %c0_i32 = arith.constant 0 : i32
    %c0_i32_0 = arith.constant 0 : i32
    %c0_i32_1 = arith.constant 0 : i32
    return %c0_i32, %c0_i32_0 : i32, i32
  }
  func.func @transform_2(%arg0: i32) -> (i32, i32) {
    %c0_i32 = arith.constant 0 : i32
    %c0_i32_0 = arith.constant 0 : i32
    %c0_i32_1 = arith.constant 0 : i32
    return %c0_i32, %c0_i32_0 : i32, i32
  }
  func.func @transform_3(%arg0: i32) -> (i32, i32, i32, i32) {
    %c0_i32 = arith.constant 0 : i32
    %c0_i32_0 = arith.constant 0 : i32
    %c0_i32_1 = arith.constant 0 : i32
    %c0_i32_2 = arith.constant 0 : i32
    return %arg0, %c0_i32, %c0_i32_0, %c0_i32_1 : i32, i32, i32, i32
  }
}

</mosaic_0001>

<llo_original>
// kernel: tpu_custom_call.1
$region0: #{tpu_custom_call.1}
  #allocation0 [shape = 'u32[]', space=smem, size = 0x4, offset = 0x4, fixed_abs, tag = 'smem constant byte address 0x4 - core index']
  #allocation1 [shape = 'u32[144,128]{1,0:T(1,128)}', space=vmem, size = 0x12000, scoped, tag = 'internal scratch']
  %s0 = inlined_call_operand.vmem [shape: f32[8,2,18,128], index: 0, kind: input, shape index: {}]
  %s1 = inlined_call_operand.hbm [shape: f32[384,384], index: 1, kind: input, shape index: {}]
  %s2 = inlined_call_operand.vmem [shape: f32[1,384], index: 2, kind: input, shape index: {}]
  %s3 = inlined_call_operand.hbm [shape: f32[8,2,16,384], index: 3, kind: output, shape index: {}]
  %s4 = sld [smem:[#allocation0]]
  $region26: #{tpu_custom_call.1} parent=0
    _
  %s6 = ssub.s32 1, %s4
  %s7 = scalar_select 0, %s6, %s4
  $region1: #{tpu_custom_call.1} parent=0
    #allocation2 [shape = 'u8[589824]{0}', space=vmem, size = 0x90000, scoped, tag = 'input window, operand 1, single buffered']
    #allocation3 [shape = 's32[1]{0}', space=sflag, size = 0x4, scoped, tag = 'scoped memory for tpu_custom_call.1']
    #allocation4 [shape = 's32[1]{0}', space=sflag, size = 0x4, scoped, tag = 'scoped memory for tpu_custom_call.1']
    #allocation5 [shape = 'u8[393216]{0}', space=vmem, size = 0x60000, scoped, tag = 'output window, operand 0, single buffered']
    %8 = vsyncpa [#allocation3], 0
    %9 = vsyncpa [#allocation4], 0
    // Predicated region
    $region2: #{tpu_custom_call.1} parent=1 // pred_check
      _
    $region3: #{tpu_custom_call.1} parent=1 // pred_check_branch
      %11 = sbr.rel (0) target = $region5
    $region4: #{tpu_custom_call.1} parent=1 // pred_region
      _
    $region5: #{tpu_custom_call.1} parent=1 // pred_fallthru
      _
    // Predicated region
    $region6: #{tpu_custom_call.1} parent=1 // pred_check
      _
    $region7: #{tpu_custom_call.1} parent=1 // pred_check_branch
      %13 = sbr.rel (0) target = $region9
    $region8: #{tpu_custom_call.1} parent=1 // pred_region
      %s15 = ssub.s32 18432, 18432
      %16 = vsyncadd [#allocation3], %s15
      %s17 = sshll.u32 [#allocation2], 4
      %s18 = int_to_ptr.vmem [resolvable:$true] %s17
      %23 = dma.hbm_to_vmem [thread:$0]  %s1, 18432, %s18, [#allocation3], 384, 384, 24
    $region9: #{tpu_custom_call.1} parent=1 // pred_fallthru
      _
    // Predicated region
    $region10: #{tpu_custom_call.1} parent=1 // pred_check
      _
    $region11: #{tpu_custom_call.1} parent=1 // pred_check_branch
      %25 = sbr.rel (0) target = $region13
    $region12: #{tpu_custom_call.1} parent=1 // pred_region
      _
    $region13: #{tpu_custom_call.1} parent=1 // pred_fallthru
      _
    // Predicated region
    $region14: #{tpu_custom_call.1} parent=1 // pred_check
      _
    $region15: #{tpu_custom_call.1} parent=1 // pred_check_branch
      %27 = sbr.rel (0) target = $region17
    $region16: #{tpu_custom_call.1} parent=1 // pred_region
      %28 = dma.done [#allocation3], 18432
    $region17: #{tpu_custom_call.1} parent=1 // pred_fallthru
      _
    %v29 = vld [vmem:[%s0] sm:$0xff]
    %v30 = vld [vmem:[%s0 + $0x8] sm:$0xff]
    %v31 = vld [vmem:[%s0 + $0x10] sm:$0x3]
    %v32 = vld [vmem:[%s0 + $0x18] sm:$0xff]
    %v33 = vld [vmem:[%s0 + $0x20] sm:$0xff]
    %v34 = vld [vmem:[%s0 + $0x28] sm:$0x3]
    %v35 = vld [vmem:[%s0 + $0x30] sm:$0xff]
    %v36 = vld [vmem:[%s0 + $0x38] sm:$0xff]
    %v37 = vld [vmem:[%s0 + $0x40] sm:$0x3]
    %v38 = vld [vmem:[%s0 + $0x48] sm:$0xff]
    %v39 = vld [vmem:[%s0 + $0x50] sm:$0xff]
    %v40 = vld [vmem:[%s0 + $0x58] sm:$0x3]
    %v41 = vld [vmem:[%s0 + $0x60] sm:$0xff]
    %v42 = vld [vmem:[%s0 + $0x68] sm:$0xff]
    %v43 = vld [vmem:[%s0 + $0x70] sm:$0x3]
    %v44 = vld [vmem:[%s0 + $0x78] sm:$0xff]
    %v45 = vld [vmem:[%s0 + $0x80] sm:$0xff]
    %v46 = vld [vmem:[%s0 + $0x88] sm:$0x3]
    %v47 = vld [vmem:[%s0 + $0x90] sm:$0xff]
    %v48 = vld [vmem:[%s0 + $0x98] sm:$0xff]
    %v49 = vld [vmem:[%s0 + $0xa0] sm:$0x3]
    %v50 = vld [vmem:[%s0 + $0xa8] sm:$0xff]
    %v51 = vld [vmem:[%s0 + $0xb0] sm:$0xff]
    %v52 = vld [vmem:[%s0 + $0xb8] sm:$0x3]
    %v53 = vld [vmem:[%s0 + $0xc0] sm:$0xff]
    %v54 = vld [vmem:[%s0 + $0xc8] sm:$0xff]
    %v55 = vld [vmem:[%s0 + $0xd0] sm:$0x3]
    %v56 = vld [vmem:[%s0 + $0xd8] sm:$0xff]
    %v57 = vld [vmem:[%s0 + $0xe0] sm:$0xff]
    %v58 = vld [vmem:[%s0 + $0xe8] sm:$0x3]
    %v59 = vld [vmem:[%s0 + $0xf0] sm:$0xff]
    %v60 = vld [vmem:[%s0 + $0xf8] sm:$0xff]
    %v61 = vld [vmem:[%s0 + $0x100] sm:$0x3]
    %v62 = vld [vmem:[%s0 + $0x108] sm:$0xff]
    %v63 = vld [vmem:[%s0 + $0x110] sm:$0xff]
    %v64 = vld [vmem:[%s0 + $0x118] sm:$0x3]
    %v65 = vld [vmem:[%s0 + $0x120] sm:$0xff]
    %v66 = vld [vmem:[%s0 + $0x128] sm:$0xff]
    %v67 = vld [vmem:[%s0 + $0x130] sm:$0x3]
    %v68 = vld [vmem:[%s0 + $0x138] sm:$0xff]
    %v69 = vld [vmem:[%s0 + $0x140] sm:$0xff]
    %v70 = vld [vmem:[%s0 + $0x148] sm:$0x3]
    %v71 = vld [vmem:[%s0 + $0x150] sm:$0xff]
    %v72 = vld [vmem:[%s0 + $0x158] sm:$0xff]
    %v73 = vld [vmem:[%s0 + $0x160] sm:$0x3]
    %v74 = vld [vmem:[%s0 + $0x168] sm:$0xff]
    %v75 = vld [vmem:[%s0 + $0x170] sm:$0xff]
    %v76 = vld [vmem:[%s0 + $0x178] sm:$0x3]
    %vm125 = vcmask 1046528
    %v126 = vrot.slane %v29, 1
    %v127 = vrot.slane %v30, 1
    %v128 = vsel %vm125, %v126, %v127
    %v129 = vrot.slane %v31, 1
    %v130 = vsel %vm125, %v127, %v129
    %v131 = vrot.slane %v32, 1
    %v132 = vrot.slane %v33, 1
    %v133 = vsel %vm125, %v131, %v132
    %v134 = vrot.slane %v34, 1
    %v135 = vsel %vm125, %v132, %v134
    %v136 = vrot.slane %v35, 1
    %v137 = vrot.slane %v36, 1
    %v138 = vsel %vm125, %v136, %v137
    %v139 = vrot.slane %v37, 1
    %v140 = vsel %vm125, %v137, %v139
    %v141 = vrot.slane %v38, 1
    %v142 = vrot.slane %v39, 1
    %v143 = vsel %vm125, %v141, %v142
    %v144 = vrot.slane %v40, 1
    %v145 = vsel %vm125, %v142, %v144
    %v146 = vrot.slane %v41, 1
    %v147 = vrot.slane %v42, 1
    %v148 = vsel %vm125, %v146, %v147
    %v149 = vrot.slane %v43, 1
    %v150 = vsel %vm125, %v147, %v149
    %v151 = vrot.slane %v44, 1
    %v152 = vrot.slane %v45, 1
    %v153 = vsel %vm125, %v151, %v152
    %v154 = vrot.slane %v46, 1
    %v155 = vsel %vm125, %v152, %v154
    %v156 = vrot.slane %v47, 1
    %v157 = vrot.slane %v48, 1
    %v158 = vsel %vm125, %v156, %v157
    %v159 = vrot.slane %v49, 1
    %v160 = vsel %vm125, %v157, %v159
    %v161 = vrot.slane %v50, 1
    %v162 = vrot.slane %v51, 1
    %v163 = vsel %vm125, %v161, %v162
    %v164 = vrot.slane %v52, 1
    %v165 = vsel %vm125, %v162, %v164
    %v166 = vrot.slane %v53, 1
    %v167 = vrot.slane %v54, 1
    %v168 = vsel %vm125, %v166, %v167
    %v169 = vrot.slane %v55, 1
    %v170 = vsel %vm125, %v167, %v169
    %v171 = vrot.slane %v56, 1
    %v172 = vrot.slane %v57, 1
    %v173 = vsel %vm125, %v171, %v172
    %v174 = vrot.slane %v58, 1
    %v175 = vsel %vm125, %v172, %v174
    %v176 = vrot.slane %v59, 1
    %v177 = vrot.slane %v60, 1
    %v178 = vsel %vm125, %v176, %v177
    %v179 = vrot.slane %v61, 1
    %v180 = vsel %vm125, %v177, %v179
    %v181 = vrot.slane %v62, 1
    %v182 = vrot.slane %v63, 1
    %v183 = vsel %vm125, %v181, %v182
    %v184 = vrot.slane %v64, 1
    %v185 = vsel %vm125, %v182, %v184
    %v186 = vrot.slane %v65, 1
    %v187 = vrot.slane %v66, 1
    %v188 = vsel %vm125, %v186, %v187
    %v189 = vrot.slane %v67, 1
    %v190 = vsel %vm125, %v187, %v189
    %v191 = vrot.slane %v68, 1
    %v192 = vrot.slane %v69, 1
    %v193 = vsel %vm125, %v191, %v192
    %v194 = vrot.slane %v70, 1
    %v195 = vsel %vm125, %v192, %v194
    %v196 = vrot.slane %v71, 1
    %v197 = vrot.slane %v72, 1
    %v198 = vsel %vm125, %v196, %v197
    %v199 = vrot.slane %v73, 1
    %v200 = vsel %vm125, %v197, %v199
    %v201 = vrot.slane %v74, 1
    %v202 = vrot.slane %v75, 1
    %v203 = vsel %vm125, %v201, %v202
    %v204 = vrot.slane %v76, 1
    %v205 = vsel %vm125, %v202, %v204
    %vm238 = vcmask 1045504
    %v239 = vrot.slane %v29, 2
    %v240 = vrot.slane %v30, 2
    %v241 = vsel %vm238, %v239, %v240
    %v242 = vrot.slane %v31, 2
    %v243 = vsel %vm238, %v240, %v242
    %v244 = vrot.slane %v32, 2
    %v245 = vrot.slane %v33, 2
    %v246 = vsel %vm238, %v244, %v245
    %v247 = vrot.slane %v34, 2
    %v248 = vsel %vm238, %v245, %v247
    %v249 = vrot.slane %v35, 2
    %v250 = vrot.slane %v36, 2
    %v251 = vsel %vm238, %v249, %v250
    %v252 = vrot.slane %v37, 2
    %v253 = vsel %vm238, %v250, %v252
    %v254 = vrot.slane %v38, 2
    %v255 = vrot.slane %v39, 2
    %v256 = vsel %vm238, %v254, %v255
    %v257 = vrot.slane %v40, 2
    %v258 = vsel %vm238, %v255, %v257
    %v259 = vrot.slane %v41, 2
    %v260 = vrot.slane %v42, 2
    %v261 = vsel %vm238, %v259, %v260
    %v262 = vrot.slane %v43, 2
    %v263 = vsel %vm238, %v260, %v262
    %v264 = vrot.slane %v44, 2
    %v265 = vrot.slane %v45, 2
    %v266 = vsel %vm238, %v264, %v265
    %v267 = vrot.slane %v46, 2
    %v268 = vsel %vm238, %v265, %v267
    %v269 = vrot.slane %v47, 2
    %v270 = vrot.slane %v48, 2
    %v271 = vsel %vm238, %v269, %v270
    %v272 = vrot.slane %v49, 2
    %v273 = vsel %vm238, %v270, %v272
    %v274 = vrot.slane %v50, 2
    %v275 = vrot.slane %v51, 2
    %v276 = vsel %vm238, %v274, %v275
    %v277 = vrot.slane %v52, 2
    %v278 = vsel %vm238, %v275, %v277
    %v279 = vrot.slane %v53, 2
    %v280 = vrot.slane %v54, 2
    %v281 = vsel %vm238, %v279, %v280
    %v282 = vrot.slane %v55, 2
    %v283 = vsel %vm238, %v280, %v282
    %v284 = vrot.slane %v56, 2
    %v285 = vrot.slane %v57, 2
    %v286 = vsel %vm238, %v284, %v285
    %v287 = vrot.slane %v58, 2
    %v288 = vsel %vm238, %v285, %v287
    %v289 = vrot.slane %v59, 2
    %v290 = vrot.slane %v60, 2
    %v291 = vsel %vm238, %v289, %v290
    %v292 = vrot.slane %v61, 2
    %v293 = vsel %vm238, %v290, %v292
    %v294 = vrot.slane %v62, 2
    %v295 = vrot.slane %v63, 2
    %v296 = vsel %vm238, %v294, %v295
    %v297 = vrot.slane %v64, 2
    %v298 = vsel %vm238, %v295, %v297
    %v299 = vrot.slane %v65, 2
    %v300 = vrot.slane %v66, 2
    %v301 = vsel %vm238, %v299, %v300
    %v302 = vrot.slane %v67, 2
    %v303 = vsel %vm238, %v300, %v302
    %v304 = vrot.slane %v68, 2
    %v305 = vrot.slane %v69, 2
    %v306 = vsel %vm238, %v304, %v305
    %v307 = vrot.slane %v70, 2
    %v308 = vsel %vm238, %v305, %v307
    %v309 = vrot.slane %v71, 2
    %v310 = vrot.slane %v72, 2
    %v311 = vsel %vm238, %v309, %v310
    %v312 = vrot.slane %v73, 2
    %v313 = vsel %vm238, %v310, %v312
    %v314 = vrot.slane %v74, 2
    %v315 = vrot.slane %v75, 2
    %v316 = vsel %vm238, %v314, %v315
    %v317 = vrot.slane %v76, 2
    %v318 = vsel %vm238, %v315, %v317
    %v351 = vld [vmem:[#allocation2] sm:$0xff]
    %v352 = vld [vmem:[#allocation2 + $0x8] sm:$0xff]
    %v353 = vld [vmem:[#allocation2 + $0x10] sm:$0xff]
    %v354 = vld [vmem:[#allocation2 + $0x18] sm:$0xff]
    %v355 = vld [vmem:[#allocation2 + $0x20] sm:$0xff]
    %v356 = vld [vmem:[#allocation2 + $0x28] sm:$0xff]
    %v357 = vld [vmem:[#allocation2 + $0x30] sm:$0xff]
    %v358 = vld [vmem:[#allocation2 + $0x38] sm:$0xff]
    %v359 = vld [vmem:[#allocation2 + $0x40] sm:$0xff]
    %v360 = vld [vmem:[#allocation2 + $0x48] sm:$0xff]
    %v361 = vld [vmem:[#allocation2 + $0x50] sm:$0xff]
    %v362 = vld [vmem:[#allocation2 + $0x58] sm:$0xff]
    %v363 = vld [vmem:[#allocation2 + $0x60] sm:$0xff]
    %v364 = vld [vmem:[#allocation2 + $0x68] sm:$0xff]
    %v365 = vld [vmem:[#allocation2 + $0x70] sm:$0xff]
    %v366 = vld [vmem:[#allocation2 + $0x78] sm:$0xff]
    %v367 = vld [vmem:[#allocation2 + $0x80] sm:$0xff]
    %v368 = vld [vmem:[#allocation2 + $0x88] sm:$0xff]
    %v369 = vld [vmem:[#allocation2 + $0x90] sm:$0xff]
    %v370 = vld [vmem:[#allocation2 + $0x98] sm:$0xff]
    %v371 = vld [vmem:[#allocation2 + $0xa0] sm:$0xff]
    %v372 = vld [vmem:[#allocation2 + $0xa8] sm:$0xff]
    %v373 = vld [vmem:[#allocation2 + $0xb0] sm:$0xff]
    %v374 = vld [vmem:[#allocation2 + $0xb8] sm:$0xff]
    %v375 = vld [vmem:[#allocation2 + $0xc0] sm:$0xff]
    %v376 = vld [vmem:[#allocation2 + $0xc8] sm:$0xff]
    %v377 = vld [vmem:[#allocation2 + $0xd0] sm:$0xff]
    %v378 = vld [vmem:[#allocation2 + $0xd8] sm:$0xff]
    %v379 = vld [vmem:[#allocation2 + $0xe0] sm:$0xff]
    %v380 = vld [vmem:[#allocation2 + $0xe8] sm:$0xff]
    %v381 = vld [vmem:[#allocation2 + $0xf0] sm:$0xff]
    %v382 = vld [vmem:[#allocation2 + $0xf8] sm:$0xff]
    %v383 = vld [vmem:[#allocation2 + $0x100] sm:$0xff]
    %v384 = vld [vmem:[#allocation2 + $0x108] sm:$0xff]
    %v385 = vld [vmem:[#allocation2 + $0x110] sm:$0xff]
    %v386 = vld [vmem:[#allocation2 + $0x118] sm:$0xff]
    %v387 = vld [vmem:[#allocation2 + $0x120] sm:$0xff]
    %v388 = vld [vmem:[#allocation2 + $0x128] sm:$0xff]
    %v389 = vld [vmem:[#allocation2 + $0x130] sm:$0xff]
    %v390 = vld [vmem:[#allocation2 + $0x138] sm:$0xff]
    %v391 = vld [vmem:[#allocation2 + $0x140] sm:$0xff]
    %v392 = vld [vmem:[#allocation2 + $0x148] sm:$0xff]
    %v393 = vld [vmem:[#allocation2 + $0x150] sm:$0xff]
    %v394 = vld [vmem:[#allocation2 + $0x158] sm:$0xff]
    %v395 = vld [vmem:[#allocation2 + $0x160] sm:$0xff]
    %v396 = vld [vmem:[#allocation2 + $0x168] sm:$0xff]
    %v397 = vld [vmem:[#allocation2 + $0x170] sm:$0xff]
    %v398 = vld [vmem:[#allocation2 + $0x178] sm:$0xff]
    %v399 = vld [vmem:[#allocation2 + $0x180] sm:$0xff]
    %v400 = vld [vmem:[#allocation2 + $0x188] sm:$0xff]
    %v401 = vld [vmem:[#allocation2 + $0x190] sm:$0xff]
    %v402 = vld [vmem:[#allocation2 + $0x198] sm:$0xff]
    %v403 = vld [vmem:[#allocation2 + $0x1a0] sm:$0xff]
    %v404 = vld [vmem:[#allocation2 + $0x1a8] sm:$0xff]
    %v405 = vld [vmem:[#allocation2 + $0x1b0] sm:$0xff]
    %v406 = vld [vmem:[#allocation2 + $0x1b8] sm:$0xff]
    %v407 = vld [vmem:[#allocation2 + $0x1c0] sm:$0xff]
    %v408 = vld [vmem:[#allocation2 + $0x1c8] sm:$0xff]
    %v409 = vld [vmem:[#allocation2 + $0x1d0] sm:$0xff]
    %v410 = vld [vmem:[#allocation2 + $0x1d8] sm:$0xff]
    %v411 = vld [vmem:[#allocation2 + $0x1e0] sm:$0xff]
    %v412 = vld [vmem:[#allocation2 + $0x1e8] sm:$0xff]
    %v413 = vld [vmem:[#allocation2 + $0x1f0] sm:$0xff]
    %v414 = vld [vmem:[#allocation2 + $0x1f8] sm:$0xff]
    %v415 = vld [vmem:[#allocation2 + $0x200] sm:$0xff]
    %v416 = vld [vmem:[#allocation2 + $0x208] sm:$0xff]
    %v417 = vld [vmem:[#allocation2 + $0x210] sm:$0xff]
    %v418 = vld [vmem:[#allocation2 + $0x218] sm:$0xff]
    %v419 = vld [vmem:[#allocation2 + $0x220] sm:$0xff]
    %v420 = vld [vmem:[#allocation2 + $0x228] sm:$0xff]
    %v421 = vld [vmem:[#allocation2 + $0x230] sm:$0xff]
    %v422 = vld [vmem:[#allocation2 + $0x238] sm:$0xff]
    %v423 = vld [vmem:[#allocation2 + $0x240] sm:$0xff]
    %v424 = vld [vmem:[#allocation2 + $0x248] sm:$0xff]
    %v425 = vld [vmem:[#allocation2 + $0x250] sm:$0xff]
    %v426 = vld [vmem:[#allocation2 + $0x258] sm:$0xff]
    %v427 = vld [vmem:[#allocation2 + $0x260] sm:$0xff]
    %v428 = vld [vmem:[#allocation2 + $0x268] sm:$0xff]
    %v429 = vld [vmem:[#allocation2 + $0x270] sm:$0xff]
    %v430 = vld [vmem:[#allocation2 + $0x278] sm:$0xff]
    %v431 = vld [vmem:[#allocation2 + $0x280] sm:$0xff]
    %v432 = vld [vmem:[#allocation2 + $0x288] sm:$0xff]
    %v433 = vld [vmem:[#allocation2 + $0x290] sm:$0xff]
    %v434 = vld [vmem:[#allocation2 + $0x298] sm:$0xff]
    %v435 = vld [vmem:[#allocation2 + $0x2a0] sm:$0xff]
    %v436 = vld [vmem:[#allocation2 + $0x2a8] sm:$0xff]
    %v437 = vld [vmem:[#allocation2 + $0x2b0] sm:$0xff]
    %v438 = vld [vmem:[#allocation2 + $0x2b8] sm:$0xff]
    %v439 = vld [vmem:[#allocation2 + $0x2c0] sm:$0xff]
    %v440 = vld [vmem:[#allocation2 + $0x2c8] sm:$0xff]
    %v441 = vld [vmem:[#allocation2 + $0x2d0] sm:$0xff]
    %v442 = vld [vmem:[#allocation2 + $0x2d8] sm:$0xff]
    %v443 = vld [vmem:[#allocation2 + $0x2e0] sm:$0xff]
    %v444 = vld [vmem:[#allocation2 + $0x2e8] sm:$0xff]
    %v445 = vld [vmem:[#allocation2 + $0x2f0] sm:$0xff]
    %v446 = vld [vmem:[#allocation2 + $0x2f8] sm:$0xff]
    %v447 = vld [vmem:[#allocation2 + $0x300] sm:$0xff]
    %v448 = vld [vmem:[#allocation2 + $0x308] sm:$0xff]
    %v449 = vld [vmem:[#allocation2 + $0x310] sm:$0xff]
    %v450 = vld [vmem:[#allocation2 + $0x318] sm:$0xff]
    %v451 = vld [vmem:[#allocation2 + $0x320] sm:$0xff]
    %v452 = vld [vmem:[#allocation2 + $0x328] sm:$0xff]
    %v453 = vld [vmem:[#allocation2 + $0x330] sm:$0xff]
    %v454 = vld [vmem:[#allocation2 + $0x338] sm:$0xff]
    %v455 = vld [vmem:[#allocation2 + $0x340] sm:$0xff]
    %v456 = vld [vmem:[#allocation2 + $0x348] sm:$0xff]
    %v457 = vld [vmem:[#allocation2 + $0x350] sm:$0xff]
    %v458 = vld [vmem:[#allocation2 + $0x358] sm:$0xff]
    %v459 = vld [vmem:[#allocation2 + $0x360] sm:$0xff]
    %v460 = vld [vmem:[#allocation2 + $0x368] sm:$0xff]
    %v461 = vld [vmem:[#allocation2 + $0x370] sm:$0xff]
    %v462 = vld [vmem:[#allocation2 + $0x378] sm:$0xff]
    %v463 = vld [vmem:[#allocation2 + $0x380] sm:$0xff]
    %v464 = vld [vmem:[#allocation2 + $0x388] sm:$0xff]
    %v465 = vld [vmem:[#allocation2 + $0x390] sm:$0xff]
    %v466 = vld [vmem:[#allocation2 + $0x398] sm:$0xff]
    %v467 = vld [vmem:[#allocation2 + $0x3a0] sm:$0xff]
    %v468 = vld [vmem:[#allocation2 + $0x3a8] sm:$0xff]
    %v469 = vld [vmem:[#allocation2 + $0x3b0] sm:$0xff]
    %v470 = vld [vmem:[#allocation2 + $0x3b8] sm:$0xff]
    %v471 = vld [vmem:[#allocation2 + $0x3c0] sm:$0xff]
    %v472 = vld [vmem:[#allocation2 + $0x3c8] sm:$0xff]
    %v473 = vld [vmem:[#allocation2 + $0x3d0] sm:$0xff]
    %v474 = vld [vmem:[#allocation2 + $0x3d8] sm:$0xff]
    %v475 = vld [vmem:[#allocation2 + $0x3e0] sm:$0xff]
    %v476 = vld [vmem:[#allocation2 + $0x3e8] sm:$0xff]
    %v477 = vld [vmem:[#allocation2 + $0x3f0] sm:$0xff]
    %v478 = vld [vmem:[#allocation2 + $0x3f8] sm:$0xff]
    %v479 = vld [vmem:[#allocation2 + $0x400] sm:$0xff]
    %v480 = vld [vmem:[#allocation2 + $0x408] sm:$0xff]
    %v481 = vld [vmem:[#allocation2 + $0x410] sm:$0xff]
    %v482 = vld [vmem:[#allocation2 + $0x418] sm:$0xff]
    %v483 = vld [vmem:[#allocation2 + $0x420] sm:$0xff]
    %v484 = vld [vmem:[#allocation2 + $0x428] sm:$0xff]
    %v485 = vld [vmem:[#allocation2 + $0x430] sm:$0xff]
    %v486 = vld [vmem:[#allocation2 + $0x438] sm:$0xff]
    %v487 = vld [vmem:[#allocation2 + $0x440] sm:$0xff]
    %v488 = vld [vmem:[#allocation2 + $0x448] sm:$0xff]
    %v489 = vld [vmem:[#allocation2 + $0x450] sm:$0xff]
    %v490 = vld [vmem:[#allocation2 + $0x458] sm:$0xff]
    %v491 = vld [vmem:[#allocation2 + $0x460] sm:$0xff]
    %v492 = vld [vmem:[#allocation2 + $0x468] sm:$0xff]
    %v493 = vld [vmem:[#allocation2 + $0x470] sm:$0xff]
    %v494 = vld [vmem:[#allocation2 + $0x478] sm:$0xff]
    %v495 = vld [vmem:[%s2] sm:$0x7]
    %v497 = vlaneseq
    %v498 = vshrl.u32 %v497, 7
    %v499 = vsub.s32 0, %v498
    %v500 = vrot.slane %v495, %v499
    %v501 = vlaneseq
    %v502 = vshrl.u32 %v501, 7
    %v503 = vsub.s32 1, %v502
    %v504 = vrot.slane %v495, %v503
    %v505 = vlaneseq
    %v506 = vshrl.u32 %v505, 7
    %v507 = vsub.s32 2, %v506
    %v508 = vrot.slane %v495, %v507
    %512 = vmatprep.subr.mxu0 %v397
    %513 = vmatpush1.msra.mxu0 %v396
    %514 = vmatprep.subr.mxu0 %v394
    %515 = vmatpush1.msra.mxu0 %v393
    %516 = vmatprep.subr.mxu0 %v391
    %517 = vmatpush1.msra.mxu0 %v390
    %518 = vmatprep.subr.mxu0 %v388
    %519 = vmatpush1.msra.mxu0 %v387
    %520 = vmatprep.subr.mxu0 %v385
    %521 = vmatpush1.msra.mxu0 %v384
    %522 = vmatprep.subr.mxu0 %v382
    %523 = vmatpush1.msra.mxu0 %v381
    %524 = vmatprep.subr.mxu0 %v379
    %525 = vmatpush1.msra.mxu0 %v378
    %526 = vmatprep.subr.mxu0 %v376
    %527 = vmatpush1.msra.mxu0 %v375
    %528 = vmatprep.subr.mxu0 %v373
    %529 = vmatpush1.msra.mxu0 %v372
    %530 = vmatprep.subr.mxu0 %v370
    %531 = vmatpush1.msra.mxu0 %v369
    %532 = vmatprep.subr.mxu0 %v367
    %533 = vmatpush1.msra.mxu0 %v366
    %534 = vmatprep.subr.mxu0 %v364
    %535 = vmatpush1.msra.mxu0 %v363
    %536 = vmatprep.subr.mxu0 %v361
    %537 = vmatpush1.msra.mxu0 %v360
    %538 = vmatprep.subr.mxu0 %v358
    %539 = vmatpush1.msra.mxu0 %v357
    %540 = vmatprep.subr.mxu0 %v355
    %541 = vmatpush1.msra.mxu0 %v354
    %542 = vmatprep.subr.mxu0 %v352
    %543 = vmatpush1.msra.mxu0 %v351
    %544 = vmatprep.subr.mxu0 %v445
    %545 = vmatpush2.msra.mxu0 %v444
    %546 = vmatprep.subr.mxu0 %v442
    %547 = vmatpush2.msra.mxu0 %v441
    %548 = vmatprep.subr.mxu0 %v439
    %549 = vmatpush2.msra.mxu0 %v438
    %550 = vmatprep.subr.mxu0 %v436
    %551 = vmatpush2.msra.mxu0 %v435
    %552 = vmatprep.subr.mxu0 %v433
    %553 = vmatpush2.msra.mxu0 %v432
    %554 = vmatprep.subr.mxu0 %v430
    %555 = vmatpush2.msra.mxu0 %v429
    %556 = vmatprep.subr.mxu0 %v427
    %557 = vmatpush2.msra.mxu0 %v426
    %558 = vmatprep.subr.mxu0 %v424
    %559 = vmatpush2.msra.mxu0 %v423
    %560 = vmatprep.subr.mxu0 %v421
    %561 = vmatpush2.msra.mxu0 %v420
    %562 = vmatprep.subr.mxu0 %v418
    %563 = vmatpush2.msra.mxu0 %v417
    %564 = vmatprep.subr.mxu0 %v415
    %565 = vmatpush2.msra.mxu0 %v414
    %566 = vmatprep.subr.mxu0 %v412
    %567 = vmatpush2.msra.mxu0 %v411
    %568 = vmatprep.subr.mxu0 %v409
    %569 = vmatpush2.msra.mxu0 %v408
    %570 = vmatprep.subr.mxu0 %v406
    %571 = vmatpush2.msra.mxu0 %v405
    %572 = vmatprep.subr.mxu0 %v403
    %573 = vmatpush2.msra.mxu0 %v402
    %574 = vmatprep.subr.mxu0 %v400
    %575 = vmatpush2.msra.mxu0 %v399
    %576 = vmatprep.mubr.f32.mxu0 %v128
    %577 = vmatmul.mubr.f32.gmra.mxu0 %v29
    %v578 = vpop.f32.mrf.mxu0
    %v579 = vadd.f32 %v500, %v578
    %v580 = vpop.f32.mrf.mxu0
    %v581 = vadd.f32 %v504, %v580
    %582 = vmatprep.mubr.f32.mxu0 %v130
    %583 = vmatmul.mubr.f32.gmra.mxu0 %v30
    %v584 = vpop.f32.mrf.mxu0
    %v585 = vadd.f32 %v500, %v584
    %v586 = vpop.f32.mrf.mxu0
    %v587 = vadd.f32 %v504, %v586
    %588 = vmatprep.mubr.f32.mxu0 %v133
    %589 = vmatmul.mubr.f32.gmra.mxu0 %v32
    %v590 = vpop.f32.mrf.mxu0
    %v591 = vadd.f32 %v500, %v590
    %v592 = vpop.f32.mrf.mxu0
    %v593 = vadd.f32 %v504, %v592
    %594 = vmatprep.mubr.f32.mxu0 %v135
    %595 = vmatmul.mubr.f32.gmra.mxu0 %v33
    %v596 = vpop.f32.mrf.mxu0
    %v597 = vadd.f32 %v500, %v596
    %v598 = vpop.f32.mrf.mxu0
    %v599 = vadd.f32 %v504, %v598
    %600 = vmatprep.mubr.f32.mxu0 %v138
    %601 = vmatmul.mubr.f32.gmra.mxu0 %v35
    %v602 = vpop.f32.mrf.mxu0
    %v603 = vadd.f32 %v500, %v602
    %v604 = vpop.f32.mrf.mxu0
    %v605 = vadd.f32 %v504, %v604
    %606 = vmatprep.mubr.f32.mxu0 %v140
    %607 = vmatmul.mubr.f32.gmra.mxu0 %v36
    %v608 = vpop.f32.mrf.mxu0
    %v609 = vadd.f32 %v500, %v608
    %v610 = vpop.f32.mrf.mxu0
    %v611 = vadd.f32 %v504, %v610
    %612 = vmatprep.mubr.f32.mxu0 %v143
    %613 = vmatmul.mubr.f32.gmra.mxu0 %v38
    %v614 = vpop.f32.mrf.mxu0
    %v615 = vadd.f32 %v500, %v614
    %v616 = vpop.f32.mrf.mxu0
    %v617 = vadd.f32 %v504, %v616
    %618 = vmatprep.mubr.f32.mxu0 %v145
    %619 = vmatmul.mubr.f32.gmra.mxu0 %v39
    %v620 = vpop.f32.mrf.mxu0
    %v621 = vadd.f32 %v500, %v620
    %v622 = vpop.f32.mrf.mxu0
    %v623 = vadd.f32 %v504, %v622
    %624 = vmatprep.mubr.f32.mxu0 %v148
    %625 = vmatmul.mubr.f32.gmra.mxu0 %v41
    %v626 = vpop.f32.mrf.mxu0
    %v627 = vadd.f32 %v500, %v626
    %v628 = vpop.f32.mrf.mxu0
    %v629 = vadd.f32 %v504, %v628
    %630 = vmatprep.mubr.f32.mxu0 %v150
    %631 = vmatmul.mubr.f32.gmra.mxu0 %v42
    %v632 = vpop.f32.mrf.mxu0
    %v633 = vadd.f32 %v500, %v632
    %v634 = vpop.f32.mrf.mxu0
    %v635 = vadd.f32 %v504, %v634
    %636 = vmatprep.mubr.f32.mxu0 %v153
    %637 = vmatmul.mubr.f32.gmra.mxu0 %v44
    %v638 = vpop.f32.mrf.mxu0
    %v639 = vadd.f32 %v500, %v638
    %v640 = vpop.f32.mrf.mxu0
    %v641 = vadd.f32 %v504, %v640
    %642 = vmatprep.mubr.f32.mxu0 %v155
    %643 = vmatmul.mubr.f32.gmra.mxu0 %v45
    %v644 = vpop.f32.mrf.mxu0
    %v645 = vadd.f32 %v500, %v644
    %v646 = vpop.f32.mrf.mxu0
    %v647 = vadd.f32 %v504, %v646
    %648 = vmatprep.mubr.f32.mxu0 %v158
    %649 = vmatmul.mubr.f32.gmra.mxu0 %v47
    %v650 = vpop.f32.mrf.mxu0
    %v651 = vadd.f32 %v500, %v650
    %v652 = vpop.f32.mrf.mxu0
    %v653 = vadd.f32 %v504, %v652
    %654 = vmatprep.mubr.f32.mxu0 %v160
    %655 = vmatmul.mubr.f32.gmra.mxu0 %v48
    %v656 = vpop.f32.mrf.mxu0
    %v657 = vadd.f32 %v500, %v656
    %v658 = vpop.f32.mrf.mxu0
    %v659 = vadd.f32 %v504, %v658
    %660 = vmatprep.mubr.f32.mxu0 %v163
    %661 = vmatmul.mubr.f32.gmra.mxu0 %v50
    %v662 = vpop.f32.mrf.mxu0
    %v663 = vadd.f32 %v500, %v662
    %v664 = vpop.f32.mrf.mxu0
    %v665 = vadd.f32 %v504, %v664
    %666 = vmatprep.mubr.f32.mxu0 %v165
    %667 = vmatmul.mubr.f32.gmra.mxu0 %v51
    %v668 = vpop.f32.mrf.mxu0
    %v669 = vadd.f32 %v500, %v668
    %v670 = vpop.f32.mrf.mxu0
    %v671 = vadd.f32 %v504, %v670
    %672 = vmatprep.mubr.f32.mxu0 %v168
    %673 = vmatmul.mubr.f32.gmra.mxu0 %v53
    %v674 = vpop.f32.mrf.mxu0
    %v675 = vadd.f32 %v500, %v674
    %v676 = vpop.f32.mrf.mxu0
    %v677 = vadd.f32 %v504, %v676
    %678 = vmatprep.mubr.f32.mxu0 %v170
    %679 = vmatmul.mubr.f32.gmra.mxu0 %v54
    %v680 = vpop.f32.mrf.mxu0
    %v681 = vadd.f32 %v500, %v680
    %v682 = vpop.f32.mrf.mxu0
    %v683 = vadd.f32 %v504, %v682
    %684 = vmatprep.mubr.f32.mxu0 %v173
    %685 = vmatmul.mubr.f32.gmra.mxu0 %v56
    %v686 = vpop.f32.mrf.mxu0
    %v687 = vadd.f32 %v500, %v686
    %v688 = vpop.f32.mrf.mxu0
    %v689 = vadd.f32 %v504, %v688
    %690 = vmatprep.mubr.f32.mxu0 %v175
    %691 = vmatmul.mubr.f32.gmra.mxu0 %v57
    %v692 = vpop.f32.mrf.mxu0
    %v693 = vadd.f32 %v500, %v692
    %v694 = vpop.f32.mrf.mxu0
    %v695 = vadd.f32 %v504, %v694
    %696 = vmatprep.mubr.f32.mxu0 %v178
    %697 = vmatmul.mubr.f32.gmra.mxu0 %v59
    %v698 = vpop.f32.mrf.mxu0
    %v699 = vadd.f32 %v500, %v698
    %v700 = vpop.f32.mrf.mxu0
    %v701 = vadd.f32 %v504, %v700
    %702 = vmatprep.mubr.f32.mxu0 %v180
    %703 = vmatmul.mubr.f32.gmra.mxu0 %v60
    %v704 = vpop.f32.mrf.mxu0
    %v705 = vadd.f32 %v500, %v704
    %v706 = vpop.f32.mrf.mxu0
    %v707 = vadd.f32 %v504, %v706
    %708 = vmatprep.mubr.f32.mxu0 %v183
    %709 = vmatmul.mubr.f32.gmra.mxu0 %v62
    %v710 = vpop.f32.mrf.mxu0
    %v711 = vadd.f32 %v500, %v710
    %v712 = vpop.f32.mrf.mxu0
    %v713 = vadd.f32 %v504, %v712
    %714 = vmatprep.mubr.f32.mxu0 %v185
    %715 = vmatmul.mubr.f32.gmra.mxu0 %v63
    %v716 = vpop.f32.mrf.mxu0
    %v717 = vadd.f32 %v500, %v716
    %v718 = vpop.f32.mrf.mxu0
    %v719 = vadd.f32 %v504, %v718
    %720 = vmatprep.mubr.f32.mxu0 %v188
    %721 = vmatmul.mubr.f32.gmra.mxu0 %v65
    %v722 = vpop.f32.mrf.mxu0
    %v723 = vadd.f32 %v500, %v722
    %v724 = vpop.f32.mrf.mxu0
    %v725 = vadd.f32 %v504, %v724
    %726 = vmatprep.mubr.f32.mxu0 %v190
    %727 = vmatmul.mubr.f32.gmra.mxu0 %v66
    %v728 = vpop.f32.mrf.mxu0
    %v729 = vadd.f32 %v500, %v728
    %v730 = vpop.f32.mrf.mxu0
    %v731 = vadd.f32 %v504, %v730
    %732 = vmatprep.mubr.f32.mxu0 %v193
    %733 = vmatmul.mubr.f32.gmra.mxu0 %v68
    %v734 = vpop.f32.mrf.mxu0
    %v735 = vadd.f32 %v500, %v734
    %v736 = vpop.f32.mrf.mxu0
    %v737 = vadd.f32 %v504, %v736
    %738 = vmatprep.mubr.f32.mxu0 %v195
    %739 = vmatmul.mubr.f32.gmra.mxu0 %v69
    %v740 = vpop.f32.mrf.mxu0
    %v741 = vadd.f32 %v500, %v740
    %v742 = vpop.f32.mrf.mxu0
    %v743 = vadd.f32 %v504, %v742
    %744 = vmatprep.mubr.f32.mxu0 %v198
    %745 = vmatmul.mubr.f32.gmra.mxu0 %v71
    %v746 = vpop.f32.mrf.mxu0
    %v747 = vadd.f32 %v500, %v746
    %v748 = vpop.f32.mrf.mxu0
    %v749 = vadd.f32 %v504, %v748
    %750 = vmatprep.mubr.f32.mxu0 %v200
    %751 = vmatmul.mubr.f32.gmra.mxu0 %v72
    %v752 = vpop.f32.mrf.mxu0
    %v753 = vadd.f32 %v500, %v752
    %v754 = vpop.f32.mrf.mxu0
    %v755 = vadd.f32 %v504, %v754
    %756 = vmatprep.mubr.f32.mxu0 %v203
    %757 = vmatmul.mubr.f32.gmra.mxu0 %v74
    %v758 = vpop.f32.mrf.mxu0
    %v759 = vadd.f32 %v500, %v758
    %v760 = vpop.f32.mrf.mxu0
    %v761 = vadd.f32 %v504, %v760
    %762 = vmatprep.mubr.f32.mxu0 %v205
    %763 = vmatmul.mubr.f32.gmra.mxu0 %v75
    %v764 = vpop.f32.mrf.mxu0
    %v765 = vadd.f32 %v500, %v764
    %v766 = vpop.f32.mrf.mxu0
    %v767 = vadd.f32 %v504, %v766
    %768 = vdwg.mxu0
    %769 = vmatprep.subr.mxu0 %v493
    %770 = vmatpush1.msra.mxu0 %v492
    %771 = vmatprep.subr.mxu0 %v490
    %772 = vmatpush1.msra.mxu0 %v489
    %773 = vmatprep.subr.mxu0 %v487
    %774 = vmatpush1.msra.mxu0 %v486
    %775 = vmatprep.subr.mxu0 %v484
    %776 = vmatpush1.msra.mxu0 %v483
    %777 = vmatprep.subr.mxu0 %v481
    %778 = vmatpush1.msra.mxu0 %v480
    %779 = vmatprep.subr.mxu0 %v478
    %780 = vmatpush1.msra.mxu0 %v477
    %781 = vmatprep.subr.mxu0 %v475
    %782 = vmatpush1.msra.mxu0 %v474
    %783 = vmatprep.subr.mxu0 %v472
    %784 = vmatpush1.msra.mxu0 %v471
    %785 = vmatprep.subr.mxu0 %v469
    %786 = vmatpush1.msra.mxu0 %v468
    %787 = vmatprep.subr.mxu0 %v466
    %788 = vmatpush1.msra.mxu0 %v465
    %789 = vmatprep.subr.mxu0 %v463
    %790 = vmatpush1.msra.mxu0 %v462
    %791 = vmatprep.subr.mxu0 %v460
    %792 = vmatpush1.msra.mxu0 %v459
    %793 = vmatprep.subr.mxu0 %v457
    %794 = vmatpush1.msra.mxu0 %v456
    %795 = vmatprep.subr.mxu0 %v454
    %796 = vmatpush1.msra.mxu0 %v453
    %797 = vmatprep.subr.mxu0 %v451
    %798 = vmatpush1.msra.mxu0 %v450
    %799 = vmatprep.subr.mxu0 %v448
    %800 = vmatpush1.msra.mxu0 %v447
    %801 = vmatprep.subr.mxu0 0.0
    %802 = vmatpush2.msra.mxu0 0.0
    %803 = vmatprep.subr.mxu0 0.0
    %804 = vmatpush2.msra.mxu0 0.0
    %805 = vmatprep.subr.mxu0 0.0
    %806 = vmatpush2.msra.mxu0 0.0
    %807 = vmatprep.subr.mxu0 0.0
    %808 = vmatpush2.msra.mxu0 0.0
    %809 = vmatprep.subr.mxu0 0.0
    %810 = vmatpush2.msra.mxu0 0.0
    %811 = vmatprep.subr.mxu0 0.0
    %812 = vmatpush2.msra.mxu0 0.0
    %813 = vmatprep.subr.mxu0 0.0
    %814 = vmatpush2.msra.mxu0 0.0
    %815 = vmatprep.subr.mxu0 0.0
    %816 = vmatpush2.msra.mxu0 0.0
    %817 = vmatprep.subr.mxu0 0.0
    %818 = vmatpush2.msra.mxu0 0.0
    %819 = vmatprep.subr.mxu0 0.0
    %820 = vmatpush2.msra.mxu0 0.0
    %821 = vmatprep.subr.mxu0 0.0
    %822 = vmatpush2.msra.mxu0 0.0
    %823 = vmatprep.subr.mxu0 0.0
    %824 = vmatpush2.msra.mxu0 0.0
    %825 = vmatprep.subr.mxu0 0.0
    %826 = vmatpush2.msra.mxu0 0.0
    %827 = vmatprep.subr.mxu0 0.0
    %828 = vmatpush2.msra.mxu0 0.0
    %829 = vmatprep.subr.mxu0 0.0
    %830 = vmatpush2.msra.mxu0 0.0
    %831 = vmatprep.subr.mxu0 0.0
    %832 = vmatpush2.msra.mxu0 0.0
    %833 = vmatprep.mubr.f32.mxu0 0.0
    %834 = vmatmul.mubr.f32.gmra.mxu0 %v241
    %v835 = vpop.f32.mrf.mxu0
    %v836 = vadd.f32 %v579, %v835
    %v837 = vpop.f32.mrf.mxu0
    %v838 = vadd.f32 %v581, %v837
    %839 = vmatprep.mubr.f32.mxu0 0.0
    %840 = vmatmul.mubr.f32.gmra.mxu0 %v243
    %v841 = vpop.f32.mrf.mxu0
    %v842 = vadd.f32 %v585, %v841
    %v843 = vpop.f32.mrf.mxu0
    %v844 = vadd.f32 %v587, %v843
    %845 = vmatprep.mubr.f32.mxu0 0.0
    %846 = vmatmul.mubr.f32.gmra.mxu0 %v246
    %v847 = vpop.f32.mrf.mxu0
    %v848 = vadd.f32 %v591, %v847
    %v849 = vpop.f32.mrf.mxu0
    %v850 = vadd.f32 %v593, %v849
    %851 = vmatprep.mubr.f32.mxu0 0.0
    %852 = vmatmul.mubr.f32.gmra.mxu0 %v248
    %v853 = vpop.f32.mrf.mxu0
    %v854 = vadd.f32 %v597, %v853
    %v855 = vpop.f32.mrf.mxu0
    %v856 = vadd.f32 %v599, %v855
    %857 = vmatprep.mubr.f32.mxu0 0.0
    %858 = vmatmul.mubr.f32.gmra.mxu0 %v251
    %v859 = vpop.f32.mrf.mxu0
    %v860 = vadd.f32 %v603, %v859
    %v861 = vpop.f32.mrf.mxu0
    %v862 = vadd.f32 %v605, %v861
    %863 = vmatprep.mubr.f32.mxu0 0.0
    %864 = vmatmul.mubr.f32.gmra.mxu0 %v253
    %v865 = vpop.f32.mrf.mxu0
    %v866 = vadd.f32 %v609, %v865
    %v867 = vpop.f32.mrf.mxu0
    %v868 = vadd.f32 %v611, %v867
    %869 = vmatprep.mubr.f32.mxu0 0.0
    %870 = vmatmul.mubr.f32.gmra.mxu0 %v256
    %v871 = vpop.f32.mrf.mxu0
    %v872 = vadd.f32 %v615, %v871
    %v873 = vpop.f32.mrf.mxu0
    %v874 = vadd.f32 %v617, %v873
    %875 = vmatprep.mubr.f32.mxu0 0.0
    %876 = vmatmul.mubr.f32.gmra.mxu0 %v258
    %v877 = vpop.f32.mrf.mxu0
    %v878 = vadd.f32 %v621, %v877
    %v879 = vpop.f32.mrf.mxu0
    %v880 = vadd.f32 %v623, %v879
    %881 = vmatprep.mubr.f32.mxu0 0.0
    %882 = vmatmul.mubr.f32.gmra.mxu0 %v261
    %v883 = vpop.f32.mrf.mxu0
    %v884 = vadd.f32 %v627, %v883
    %v885 = vpop.f32.mrf.mxu0
    %v886 = vadd.f32 %v629, %v885
    %887 = vmatprep.mubr.f32.mxu0 0.0
    %888 = vmatmul.mubr.f32.gmra.mxu0 %v263
    %v889 = vpop.f32.mrf.mxu0
    %v890 = vadd.f32 %v633, %v889
    %v891 = vpop.f32.mrf.mxu0
    %v892 = vadd.f32 %v635, %v891
    %893 = vmatprep.mubr.f32.mxu0 0.0
    %894 = vmatmul.mubr.f32.gmra.mxu0 %v266
    %v895 = vpop.f32.mrf.mxu0
    %v896 = vadd.f32 %v639, %v895
    %v897 = vpop.f32.mrf.mxu0
    %v898 = vadd.f32 %v641, %v897
    %899 = vmatprep.mubr.f32.mxu0 0.0
    %900 = vmatmul.mubr.f32.gmra.mxu0 %v268
    %v901 = vpop.f32.mrf.mxu0
    %v902 = vadd.f32 %v645, %v901
    %v903 = vpop.f32.mrf.mxu0
    %v904 = vadd.f32 %v647, %v903
    %905 = vmatprep.mubr.f32.mxu0 0.0
    %906 = vmatmul.mubr.f32.gmra.mxu0 %v271
    %v907 = vpop.f32.mrf.mxu0
    %v908 = vadd.f32 %v651, %v907
    %v909 = vpop.f32.mrf.mxu0
    %v910 = vadd.f32 %v653, %v909
    %911 = vmatprep.mubr.f32.mxu0 0.0
    %912 = vmatmul.mubr.f32.gmra.mxu0 %v273
    %v913 = vpop.f32.mrf.mxu0
    %v914 = vadd.f32 %v657, %v913
    %v915 = vpop.f32.mrf.mxu0
    %v916 = vadd.f32 %v659, %v915
    %917 = vmatprep.mubr.f32.mxu0 0.0
    %918 = vmatmul.mubr.f32.gmra.mxu0 %v276
    %v919 = vpop.f32.mrf.mxu0
    %v920 = vadd.f32 %v663, %v919
    %v921 = vpop.f32.mrf.mxu0
    %v922 = vadd.f32 %v665, %v921
    %923 = vmatprep.mubr.f32.mxu0 0.0
    %924 = vmatmul.mubr.f32.gmra.mxu0 %v278
    %v925 = vpop.f32.mrf.mxu0
    %v926 = vadd.f32 %v669, %v925
    %v927 = vpop.f32.mrf.mxu0
    %v928 = vadd.f32 %v671, %v927
    %929 = vmatprep.mubr.f32.mxu0 0.0
    %930 = vmatmul.mubr.f32.gmra.mxu0 %v281
    %v931 = vpop.f32.mrf.mxu0
    %v932 = vadd.f32 %v675, %v931
    %v933 = vpop.f32.mrf.mxu0
    %v934 = vadd.f32 %v677, %v933
    %935 = vmatprep.mubr.f32.mxu0 0.0
    %936 = vmatmul.mubr.f32.gmra.mxu0 %v283
    %v937 = vpop.f32.mrf.mxu0
    %v938 = vadd.f32 %v681, %v937
    %v939 = vpop.f32.mrf.mxu0
    %v940 = vadd.f32 %v683, %v939
    %941 = vmatprep.mubr.f32.mxu0 0.0
    %942 = vmatmul.mubr.f32.gmra.mxu0 %v286
    %v943 = vpop.f32.mrf.mxu0
    %v944 = vadd.f32 %v687, %v943
    %v945 = vpop.f32.mrf.mxu0
    %v946 = vadd.f32 %v689, %v945
    %947 = vmatprep.mubr.f32.mxu0 0.0
    %948 = vmatmul.mubr.f32.gmra.mxu0 %v288
    %v949 = vpop.f32.mrf.mxu0
    %v950 = vadd.f32 %v693, %v949
    %v951 = vpop.f32.mrf.mxu0
    %v952 = vadd.f32 %v695, %v951
    %953 = vmatprep.mubr.f32.mxu0 0.0
    %954 = vmatmul.mubr.f32.gmra.mxu0 %v291
    %v955 = vpop.f32.mrf.mxu0
    %v956 = vadd.f32 %v699, %v955
    %v957 = vpop.f32.mrf.mxu0
    %v958 = vadd.f32 %v701, %v957
    %959 = vmatprep.mubr.f32.mxu0 0.0
    %960 = vmatmul.mubr.f32.gmra.mxu0 %v293
    %v961 = vpop.f32.mrf.mxu0
    %v962 = vadd.f32 %v705, %v961
    %v963 = vpop.f32.mrf.mxu0
    %v964 = vadd.f32 %v707, %v963
    %965 = vmatprep.mubr.f32.mxu0 0.0
    %966 = vmatmul.mubr.f32.gmra.mxu0 %v296
    %v967 = vpop.f32.mrf.mxu0
    %v968 = vadd.f32 %v711, %v967
    %v969 = vpop.f32.mrf.mxu0
    %v970 = vadd.f32 %v713, %v969
    %971 = vmatprep.mubr.f32.mxu0 0.0
    %972 = vmatmul.mubr.f32.gmra.mxu0 %v298
    %v973 = vpop.f32.mrf.mxu0
    %v974 = vadd.f32 %v717, %v973
    %v975 = vpop.f32.mrf.mxu0
    %v976 = vadd.f32 %v719, %v975
    %977 = vmatprep.mubr.f32.mxu0 0.0
    %978 = vmatmul.mubr.f32.gmra.mxu0 %v301
    %v979 = vpop.f32.mrf.mxu0
    %v980 = vadd.f32 %v723, %v979
    %v981 = vpop.f32.mrf.mxu0
    %v982 = vadd.f32 %v725, %v981
    %983 = vmatprep.mubr.f32.mxu0 0.0
    %984 = vmatmul.mubr.f32.gmra.mxu0 %v303
    %v985 = vpop.f32.mrf.mxu0
    %v986 = vadd.f32 %v729, %v985
    %v987 = vpop.f32.mrf.mxu0
    %v988 = vadd.f32 %v731, %v987
    %989 = vmatprep.mubr.f32.mxu0 0.0
    %990 = vmatmul.mubr.f32.gmra.mxu0 %v306
    %v991 = vpop.f32.mrf.mxu0
    %v992 = vadd.f32 %v735, %v991
    %v993 = vpop.f32.mrf.mxu0
    %v994 = vadd.f32 %v737, %v993
    %995 = vmatprep.mubr.f32.mxu0 0.0
    %996 = vmatmul.mubr.f32.gmra.mxu0 %v308
    %v997 = vpop.f32.mrf.mxu0
    %v998 = vadd.f32 %v741, %v997
    %v999 = vpop.f32.mrf.mxu0
    %v1000 = vadd.f32 %v743, %v999
    %1001 = vmatprep.mubr.f32.mxu0 0.0
    %1002 = vmatmul.mubr.f32.gmra.mxu0 %v311
    %v1003 = vpop.f32.mrf.mxu0
    %v1004 = vadd.f32 %v747, %v1003
    %v1005 = vpop.f32.mrf.mxu0
    %v1006 = vadd.f32 %v749, %v1005
    %1007 = vmatprep.mubr.f32.mxu0 0.0
    %1008 = vmatmul.mubr.f32.gmra.mxu0 %v313
    %v1009 = vpop.f32.mrf.mxu0
    %v1010 = vadd.f32 %v753, %v1009
    %v1011 = vpop.f32.mrf.mxu0
    %v1012 = vadd.f32 %v755, %v1011
    %1013 = vmatprep.mubr.f32.mxu0 0.0
    %1014 = vmatmul.mubr.f32.gmra.mxu0 %v316
    %v1015 = vpop.f32.mrf.mxu0
    %v1016 = vadd.f32 %v759, %v1015
    %v1017 = vpop.f32.mrf.mxu0
    %v1018 = vadd.f32 %v761, %v1017
    %1019 = vmatprep.mubr.f32.mxu0 0.0
    %1020 = vmatmul.mubr.f32.gmra.mxu0 %v318
    %v1021 = vpop.f32.mrf.mxu0
    %v1022 = vadd.f32 %v765, %v1021
    %v1023 = vpop.f32.mrf.mxu0
    %v1024 = vadd.f32 %v767, %v1023
    %1025 = vdwg.mxu0
    %1026 = vmatprep.subr.mxu0 0.0
    %1027 = vmatpush1.msra.mxu0 %v398
    %1028 = vmatprep.subr.mxu0 0.0
    %1029 = vmatpush1.msra.mxu0 %v395
    %1030 = vmatprep.subr.mxu0 0.0
    %1031 = vmatpush1.msra.mxu0 %v392
    %1032 = vmatprep.subr.mxu0 0.0
    %1033 = vmatpush1.msra.mxu0 %v389
    %1034 = vmatprep.subr.mxu0 0.0
    %1035 = vmatpush1.msra.mxu0 %v386
    %1036 = vmatprep.subr.mxu0 0.0
    %1037 = vmatpush1.msra.mxu0 %v383
    %1038 = vmatprep.subr.mxu0 0.0
    %1039 = vmatpush1.msra.mxu0 %v380
    %1040 = vmatprep.subr.mxu0 0.0
    %1041 = vmatpush1.msra.mxu0 %v377
    %1042 = vmatprep.subr.mxu0 0.0
    %1043 = vmatpush1.msra.mxu0 %v374
    %1044 = vmatprep.subr.mxu0 0.0
    %1045 = vmatpush1.msra.mxu0 %v371
    %1046 = vmatprep.subr.mxu0 0.0
    %1047 = vmatpush1.msra.mxu0 %v368
    %1048 = vmatprep.subr.mxu0 0.0
    %1049 = vmatpush1.msra.mxu0 %v365
    %1050 = vmatprep.subr.mxu0 0.0
    %1051 = vmatpush1.msra.mxu0 %v362
    %1052 = vmatprep.subr.mxu0 0.0
    %1053 = vmatpush1.msra.mxu0 %v359
    %1054 = vmatprep.subr.mxu0 0.0
    %1055 = vmatpush1.msra.mxu0 %v356
    %1056 = vmatprep.subr.mxu0 0.0
    %1057 = vmatpush1.msra.mxu0 %v353
    %1058 = vmatprep.subr.mxu0 0.0
    %1059 = vmatpush2.msra.mxu0 %v446
    %1060 = vmatprep.subr.mxu0 0.0
    %1061 = vmatpush2.msra.mxu0 %v443
    %1062 = vmatprep.subr.mxu0 0.0
    %1063 = vmatpush2.msra.mxu0 %v440
    %1064 = vmatprep.subr.mxu0 0.0
    %1065 = vmatpush2.msra.mxu0 %v437
    %1066 = vmatprep.subr.mxu0 0.0
    %1067 = vmatpush2.msra.mxu0 %v434
    %1068 = vmatprep.subr.mxu0 0.0
    %1069 = vmatpush2.msra.mxu0 %v431
    %1070 = vmatprep.subr.mxu0 0.0
    %1071 = vmatpush2.msra.mxu0 %v428
    %1072 = vmatprep.subr.mxu0 0.0
    %1073 = vmatpush2.msra.mxu0 %v425
    %1074 = vmatprep.subr.mxu0 0.0
    %1075 = vmatpush2.msra.mxu0 %v422
    %1076 = vmatprep.subr.mxu0 0.0
    %1077 = vmatpush2.msra.mxu0 %v419
    %1078 = vmatprep.subr.mxu0 0.0
    %1079 = vmatpush2.msra.mxu0 %v416
    %1080 = vmatprep.subr.mxu0 0.0
    %1081 = vmatpush2.msra.mxu0 %v413
    %1082 = vmatprep.subr.mxu0 0.0
    %1083 = vmatpush2.msra.mxu0 %v410
    %1084 = vmatprep.subr.mxu0 0.0
    %1085 = vmatpush2.msra.mxu0 %v407
    %1086 = vmatprep.subr.mxu0 0.0
    %1087 = vmatpush2.msra.mxu0 %v404
    %1088 = vmatprep.subr.mxu0 0.0
    %1089 = vmatpush2.msra.mxu0 %v401
    %1090 = vmatprep.mubr.f32.mxu0 %v128
    %1091 = vmatmul.mubr.f32.gmra.mxu0 %v29
    %v1092 = vpop.f32.mrf.mxu0
    %v1093 = vadd.f32 %v508, %v1092
    %v1094 = vpop.f32.mrf.mxu0
    %1095 = vmatprep.mubr.f32.mxu0 %v130
    %1096 = vmatmul.mubr.f32.gmra.mxu0 %v30
    %v1097 = vpop.f32.mrf.mxu0
    %v1098 = vadd.f32 %v508, %v1097
    %v1099 = vpop.f32.mrf.mxu0
    %1100 = vmatprep.mubr.f32.mxu0 %v133
    %1101 = vmatmul.mubr.f32.gmra.mxu0 %v32
    %v1102 = vpop.f32.mrf.mxu0
    %v1103 = vadd.f32 %v508, %v1102
    %v1104 = vpop.f32.mrf.mxu0
    %1105 = vmatprep.mubr.f32.mxu0 %v135
    %1106 = vmatmul.mubr.f32.gmra.mxu0 %v33
    %v1107 = vpop.f32.mrf.mxu0
    %v1108 = vadd.f32 %v508, %v1107
    %v1109 = vpop.f32.mrf.mxu0
    %1110 = vmatprep.mubr.f32.mxu0 %v138
    %1111 = vmatmul.mubr.f32.gmra.mxu0 %v35
    %v1112 = vpop.f32.mrf.mxu0
    %v1113 = vadd.f32 %v508, %v1112
    %v1114 = vpop.f32.mrf.mxu0
    %1115 = vmatprep.mubr.f32.mxu0 %v140
    %1116 = vmatmul.mubr.f32.gmra.mxu0 %v36
    %v1117 = vpop.f32.mrf.mxu0
    %v1118 = vadd.f32 %v508, %v1117
    %v1119 = vpop.f32.mrf.mxu0
    %1120 = vmatprep.mubr.f32.mxu0 %v143
    %1121 = vmatmul.mubr.f32.gmra.mxu0 %v38
    %v1122 = vpop.f32.mrf.mxu0
    %v1123 = vadd.f32 %v508, %v1122
    %v1124 = vpop.f32.mrf.mxu0
    %1125 = vmatprep.mubr.f32.mxu0 %v145
    %1126 = vmatmul.mubr.f32.gmra.mxu0 %v39
    %v1127 = vpop.f32.mrf.mxu0
    %v1128 = vadd.f32 %v508, %v1127
    %v1129 = vpop.f32.mrf.mxu0
    %1130 = vmatprep.mubr.f32.mxu0 %v148
    %1131 = vmatmul.mubr.f32.gmra.mxu0 %v41
    %v1132 = vpop.f32.mrf.mxu0
    %v1133 = vadd.f32 %v508, %v1132
    %v1134 = vpop.f32.mrf.mxu0
    %1135 = vmatprep.mubr.f32.mxu0 %v150
    %1136 = vmatmul.mubr.f32.gmra.mxu0 %v42
    %v1137 = vpop.f32.mrf.mxu0
    %v1138 = vadd.f32 %v508, %v1137
    %v1139 = vpop.f32.mrf.mxu0
    %1140 = vmatprep.mubr.f32.mxu0 %v153
    %1141 = vmatmul.mubr.f32.gmra.mxu0 %v44
    %v1142 = vpop.f32.mrf.mxu0
    %v1143 = vadd.f32 %v508, %v1142
    %v1144 = vpop.f32.mrf.mxu0
    %1145 = vmatprep.mubr.f32.mxu0 %v155
    %1146 = vmatmul.mubr.f32.gmra.mxu0 %v45
    %v1147 = vpop.f32.mrf.mxu0
    %v1148 = vadd.f32 %v508, %v1147
    %v1149 = vpop.f32.mrf.mxu0
    %1150 = vmatprep.mubr.f32.mxu0 %v158
    %1151 = vmatmul.mubr.f32.gmra.mxu0 %v47
    %v1152 = vpop.f32.mrf.mxu0
    %v1153 = vadd.f32 %v508, %v1152
    %v1154 = vpop.f32.mrf.mxu0
    %1155 = vmatprep.mubr.f32.mxu0 %v160
    %1156 = vmatmul.mubr.f32.gmra.mxu0 %v48
    %v1157 = vpop.f32.mrf.mxu0
    %v1158 = vadd.f32 %v508, %v1157
    %v1159 = vpop.f32.mrf.mxu0
    %1160 = vmatprep.mubr.f32.mxu0 %v163
    %1161 = vmatmul.mubr.f32.gmra.mxu0 %v50
    %v1162 = vpop.f32.mrf.mxu0
    %v1163 = vadd.f32 %v508, %v1162
    %v1164 = vpop.f32.mrf.mxu0
    %1165 = vmatprep.mubr.f32.mxu0 %v165
    %1166 = vmatmul.mubr.f32.gmra.mxu0 %v51
    %v1167 = vpop.f32.mrf.mxu0
    %v1168 = vadd.f32 %v508, %v1167
    %v1169 = vpop.f32.mrf.mxu0
    %1170 = vmatprep.mubr.f32.mxu0 %v168
    %1171 = vmatmul.mubr.f32.gmra.mxu0 %v53
    %v1172 = vpop.f32.mrf.mxu0
    %v1173 = vadd.f32 %v508, %v1172
    %v1174 = vpop.f32.mrf.mxu0
    %1175 = vmatprep.mubr.f32.mxu0 %v170
    %1176 = vmatmul.mubr.f32.gmra.mxu0 %v54
    %v1177 = vpop.f32.mrf.mxu0
    %v1178 = vadd.f32 %v508, %v1177
    %v1179 = vpop.f32.mrf.mxu0
    %1180 = vmatprep.mubr.f32.mxu0 %v173
    %1181 = vmatmul.mubr.f32.gmra.mxu0 %v56
    %v1182 = vpop.f32.mrf.mxu0
    %v1183 = vadd.f32 %v508, %v1182
    %v1184 = vpop.f32.mrf.mxu0
    %1185 = vmatprep.mubr.f32.mxu0 %v175
    %1186 = vmatmul.mubr.f32.gmra.mxu0 %v57
    %v1187 = vpop.f32.mrf.mxu0
    %v1188 = vadd.f32 %v508, %v1187
    %v1189 = vpop.f32.mrf.mxu0
    %1190 = vmatprep.mubr.f32.mxu0 %v178
    %1191 = vmatmul.mubr.f32.gmra.mxu0 %v59
    %v1192 = vpop.f32.mrf.mxu0
    %v1193 = vadd.f32 %v508, %v1192
    %v1194 = vpop.f32.mrf.mxu0
    %1195 = vmatprep.mubr.f32.mxu0 %v180
    %1196 = vmatmul.mubr.f32.gmra.mxu0 %v60
    %v1197 = vpop.f32.mrf.mxu0
    %v1198 = vadd.f32 %v508, %v1197
    %v1199 = vpop.f32.mrf.mxu0
    %1200 = vmatprep.mubr.f32.mxu0 %v183
    %1201 = vmatmul.mubr.f32.gmra.mxu0 %v62
    %v1202 = vpop.f32.mrf.mxu0
    %v1203 = vadd.f32 %v508, %v1202
    %v1204 = vpop.f32.mrf.mxu0
    %1205 = vmatprep.mubr.f32.mxu0 %v185
    %1206 = vmatmul.mubr.f32.gmra.mxu0 %v63
    %v1207 = vpop.f32.mrf.mxu0
    %v1208 = vadd.f32 %v508, %v1207
    %v1209 = vpop.f32.mrf.mxu0
    %1210 = vmatprep.mubr.f32.mxu0 %v188
    %1211 = vmatmul.mubr.f32.gmra.mxu0 %v65
    %v1212 = vpop.f32.mrf.mxu0
    %v1213 = vadd.f32 %v508, %v1212
    %v1214 = vpop.f32.mrf.mxu0
    %1215 = vmatprep.mubr.f32.mxu0 %v190
    %1216 = vmatmul.mubr.f32.gmra.mxu0 %v66
    %v1217 = vpop.f32.mrf.mxu0
    %v1218 = vadd.f32 %v508, %v1217
    %v1219 = vpop.f32.mrf.mxu0
    %1220 = vmatprep.mubr.f32.mxu0 %v193
    %1221 = vmatmul.mubr.f32.gmra.mxu0 %v68
    %v1222 = vpop.f32.mrf.mxu0
    %v1223 = vadd.f32 %v508, %v1222
    %v1224 = vpop.f32.mrf.mxu0
    %1225 = vmatprep.mubr.f32.mxu0 %v195
    %1226 = vmatmul.mubr.f32.gmra.mxu0 %v69
    %v1227 = vpop.f32.mrf.mxu0
    %v1228 = vadd.f32 %v508, %v1227
    %v1229 = vpop.f32.mrf.mxu0
    %1230 = vmatprep.mubr.f32.mxu0 %v198
    %1231 = vmatmul.mubr.f32.gmra.mxu0 %v71
    %v1232 = vpop.f32.mrf.mxu0
    %v1233 = vadd.f32 %v508, %v1232
    %v1234 = vpop.f32.mrf.mxu0
    %1235 = vmatprep.mubr.f32.mxu0 %v200
    %1236 = vmatmul.mubr.f32.gmra.mxu0 %v72
    %v1237 = vpop.f32.mrf.mxu0
    %v1238 = vadd.f32 %v508, %v1237
    %v1239 = vpop.f32.mrf.mxu0
    %1240 = vmatprep.mubr.f32.mxu0 %v203
    %1241 = vmatmul.mubr.f32.gmra.mxu0 %v74
    %v1242 = vpop.f32.mrf.mxu0
    %v1243 = vadd.f32 %v508, %v1242
    %v1244 = vpop.f32.mrf.mxu0
    %1245 = vmatprep.mubr.f32.mxu0 %v205
    %1246 = vmatmul.mubr.f32.gmra.mxu0 %v75
    %v1247 = vpop.f32.mrf.mxu0
    %v1248 = vadd.f32 %v508, %v1247
    %v1249 = vpop.f32.mrf.mxu0
    %1250 = vdwg.mxu0
    %1251 = vmatprep.subr.mxu0 0.0
    %1252 = vmatpush1.msra.mxu0 %v494
    %1253 = vmatprep.subr.mxu0 0.0
    %1254 = vmatpush1.msra.mxu0 %v491
    %1255 = vmatprep.subr.mxu0 0.0
    %1256 = vmatpush1.msra.mxu0 %v488
    %1257 = vmatprep.subr.mxu0 0.0
    %1258 = vmatpush1.msra.mxu0 %v485
    %1259 = vmatprep.subr.mxu0 0.0
    %1260 = vmatpush1.msra.mxu0 %v482
    %1261 = vmatprep.subr.mxu0 0.0
    %1262 = vmatpush1.msra.mxu0 %v479
    %1263 = vmatprep.subr.mxu0 0.0
    %1264 = vmatpush1.msra.mxu0 %v476
    %1265 = vmatprep.subr.mxu0 0.0
    %1266 = vmatpush1.msra.mxu0 %v473
    %1267 = vmatprep.subr.mxu0 0.0
    %1268 = vmatpush1.msra.mxu0 %v470
    %1269 = vmatprep.subr.mxu0 0.0
    %1270 = vmatpush1.msra.mxu0 %v467
    %1271 = vmatprep.subr.mxu0 0.0
    %1272 = vmatpush1.msra.mxu0 %v464
    %1273 = vmatprep.subr.mxu0 0.0
    %1274 = vmatpush1.msra.mxu0 %v461
    %1275 = vmatprep.subr.mxu0 0.0
    %1276 = vmatpush1.msra.mxu0 %v458
    %1277 = vmatprep.subr.mxu0 0.0
    %1278 = vmatpush1.msra.mxu0 %v455
    %1279 = vmatprep.subr.mxu0 0.0
    %1280 = vmatpush1.msra.mxu0 %v452
    %1281 = vmatprep.subr.mxu0 0.0
    %1282 = vmatpush1.msra.mxu0 %v449
    %1283 = vmatprep.subr.mxu0 0.0
    %1284 = vmatpush2.msra.mxu0 0.0
    %1285 = vmatprep.subr.mxu0 0.0
    %1286 = vmatpush2.msra.mxu0 0.0
    %1287 = vmatprep.subr.mxu0 0.0
    %1288 = vmatpush2.msra.mxu0 0.0
    %1289 = vmatprep.subr.mxu0 0.0
    %1290 = vmatpush2.msra.mxu0 0.0
    %1291 = vmatprep.subr.mxu0 0.0
    %1292 = vmatpush2.msra.mxu0 0.0
    %1293 = vmatprep.subr.mxu0 0.0
    %1294 = vmatpush2.msra.mxu0 0.0
    %1295 = vmatprep.subr.mxu0 0.0
    %1296 = vmatpush2.msra.mxu0 0.0
    %1297 = vmatprep.subr.mxu0 0.0
    %1298 = vmatpush2.msra.mxu0 0.0
    %1299 = vmatprep.subr.mxu0 0.0
    %1300 = vmatpush2.msra.mxu0 0.0
    %1301 = vmatprep.subr.mxu0 0.0
    %1302 = vmatpush2.msra.mxu0 0.0
    %1303 = vmatprep.subr.mxu0 0.0
    %1304 = vmatpush2.msra.mxu0 0.0
    %1305 = vmatprep.subr.mxu0 0.0
    %1306 = vmatpush2.msra.mxu0 0.0
    %1307 = vmatprep.subr.mxu0 0.0
    %1308 = vmatpush2.msra.mxu0 0.0
    %1309 = vmatprep.subr.mxu0 0.0
    %1310 = vmatpush2.msra.mxu0 0.0
    %1311 = vmatprep.subr.mxu0 0.0
    %1312 = vmatpush2.msra.mxu0 0.0
    %1313 = vmatprep.subr.mxu0 0.0
    %1314 = vmatpush2.msra.mxu0 0.0
    %1315 = vmatprep.mubr.f32.mxu0 0.0
    %1316 = vmatmul.mubr.f32.gmra.mxu0 %v241
    %v1317 = vpop.f32.mrf.mxu0
    %v1318 = vadd.f32 %v1093, %v1317
    %v1319 = vpop.f32.mrf.mxu0
    %1320 = vmatprep.mubr.f32.mxu0 0.0
    %1321 = vmatmul.mubr.f32.gmra.mxu0 %v243
    %v1322 = vpop.f32.mrf.mxu0
    %v1323 = vadd.f32 %v1098, %v1322
    %v1324 = vpop.f32.mrf.mxu0
    %1325 = vmatprep.mubr.f32.mxu0 0.0
    %1326 = vmatmul.mubr.f32.gmra.mxu0 %v246
    %v1327 = vpop.f32.mrf.mxu0
    %v1328 = vadd.f32 %v1103, %v1327
    %v1329 = vpop.f32.mrf.mxu0
    %1330 = vmatprep.mubr.f32.mxu0 0.0
    %1331 = vmatmul.mubr.f32.gmra.mxu0 %v248
    %v1332 = vpop.f32.mrf.mxu0
    %v1333 = vadd.f32 %v1108, %v1332
    %v1334 = vpop.f32.mrf.mxu0
    %1335 = vmatprep.mubr.f32.mxu0 0.0
    %1336 = vmatmul.mubr.f32.gmra.mxu0 %v251
    %v1337 = vpop.f32.mrf.mxu0
    %v1338 = vadd.f32 %v1113, %v1337
    %v1339 = vpop.f32.mrf.mxu0
    %1340 = vmatprep.mubr.f32.mxu0 0.0
    %1341 = vmatmul.mubr.f32.gmra.mxu0 %v253
    %v1342 = vpop.f32.mrf.mxu0
    %v1343 = vadd.f32 %v1118, %v1342
    %v1344 = vpop.f32.mrf.mxu0
    %1345 = vmatprep.mubr.f32.mxu0 0.0
    %1346 = vmatmul.mubr.f32.gmra.mxu0 %v256
    %v1347 = vpop.f32.mrf.mxu0
    %v1348 = vadd.f32 %v1123, %v1347
    %v1349 = vpop.f32.mrf.mxu0
    %1350 = vmatprep.mubr.f32.mxu0 0.0
    %1351 = vmatmul.mubr.f32.gmra.mxu0 %v258
    %v1352 = vpop.f32.mrf.mxu0
    %v1353 = vadd.f32 %v1128, %v1352
    %v1354 = vpop.f32.mrf.mxu0
    %1355 = vmatprep.mubr.f32.mxu0 0.0
    %1356 = vmatmul.mubr.f32.gmra.mxu0 %v261
    %v1357 = vpop.f32.mrf.mxu0
    %v1358 = vadd.f32 %v1133, %v1357
    %v1359 = vpop.f32.mrf.mxu0
    %1360 = vmatprep.mubr.f32.mxu0 0.0
    %1361 = vmatmul.mubr.f32.gmra.mxu0 %v263
    %v1362 = vpop.f32.mrf.mxu0
    %v1363 = vadd.f32 %v1138, %v1362
    %v1364 = vpop.f32.mrf.mxu0
    %1365 = vmatprep.mubr.f32.mxu0 0.0
    %1366 = vmatmul.mubr.f32.gmra.mxu0 %v266
    %v1367 = vpop.f32.mrf.mxu0
    %v1368 = vadd.f32 %v1143, %v1367
    %v1369 = vpop.f32.mrf.mxu0
    %1370 = vmatprep.mubr.f32.mxu0 0.0
    %1371 = vmatmul.mubr.f32.gmra.mxu0 %v268
    %v1372 = vpop.f32.mrf.mxu0
    %v1373 = vadd.f32 %v1148, %v1372
    %v1374 = vpop.f32.mrf.mxu0
    %1375 = vmatprep.mubr.f32.mxu0 0.0
    %1376 = vmatmul.mubr.f32.gmra.mxu0 %v271
    %v1377 = vpop.f32.mrf.mxu0
    %v1378 = vadd.f32 %v1153, %v1377
    %v1379 = vpop.f32.mrf.mxu0
    %1380 = vmatprep.mubr.f32.mxu0 0.0
    %1381 = vmatmul.mubr.f32.gmra.mxu0 %v273
    %v1382 = vpop.f32.mrf.mxu0
    %v1383 = vadd.f32 %v1158, %v1382
    %v1384 = vpop.f32.mrf.mxu0
    %1385 = vmatprep.mubr.f32.mxu0 0.0
    %1386 = vmatmul.mubr.f32.gmra.mxu0 %v276
    %v1387 = vpop.f32.mrf.mxu0
    %v1388 = vadd.f32 %v1163, %v1387
    %v1389 = vpop.f32.mrf.mxu0
    %1390 = vmatprep.mubr.f32.mxu0 0.0
    %1391 = vmatmul.mubr.f32.gmra.mxu0 %v278
    %v1392 = vpop.f32.mrf.mxu0
    %v1393 = vadd.f32 %v1168, %v1392
    %v1394 = vpop.f32.mrf.mxu0
    %1395 = vmatprep.mubr.f32.mxu0 0.0
    %1396 = vmatmul.mubr.f32.gmra.mxu0 %v281
    %v1397 = vpop.f32.mrf.mxu0
    %v1398 = vadd.f32 %v1173, %v1397
    %v1399 = vpop.f32.mrf.mxu0
    %1400 = vmatprep.mubr.f32.mxu0 0.0
    %1401 = vmatmul.mubr.f32.gmra.mxu0 %v283
    %v1402 = vpop.f32.mrf.mxu0
    %v1403 = vadd.f32 %v1178, %v1402
    %v1404 = vpop.f32.mrf.mxu0
    %1405 = vmatprep.mubr.f32.mxu0 0.0
    %1406 = vmatmul.mubr.f32.gmra.mxu0 %v286
    %v1407 = vpop.f32.mrf.mxu0
    %v1408 = vadd.f32 %v1183, %v1407
    %v1409 = vpop.f32.mrf.mxu0
    %1410 = vmatprep.mubr.f32.mxu0 0.0
    %1411 = vmatmul.mubr.f32.gmra.mxu0 %v288
    %v1412 = vpop.f32.mrf.mxu0
    %v1413 = vadd.f32 %v1188, %v1412
    %v1414 = vpop.f32.mrf.mxu0
    %1415 = vmatprep.mubr.f32.mxu0 0.0
    %1416 = vmatmul.mubr.f32.gmra.mxu0 %v291
    %v1417 = vpop.f32.mrf.mxu0
    %v1418 = vadd.f32 %v1193, %v1417
    %v1419 = vpop.f32.mrf.mxu0
    %1420 = vmatprep.mubr.f32.mxu0 0.0
    %1421 = vmatmul.mubr.f32.gmra.mxu0 %v293
    %v1422 = vpop.f32.mrf.mxu0
    %v1423 = vadd.f32 %v1198, %v1422
    %v1424 = vpop.f32.mrf.mxu0
    %1425 = vmatprep.mubr.f32.mxu0 0.0
    %1426 = vmatmul.mubr.f32.gmra.mxu0 %v296
    %v1427 = vpop.f32.mrf.mxu0
    %v1428 = vadd.f32 %v1203, %v1427
    %v1429 = vpop.f32.mrf.mxu0
    %1430 = vmatprep.mubr.f32.mxu0 0.0
    %1431 = vmatmul.mubr.f32.gmra.mxu0 %v298
    %v1432 = vpop.f32.mrf.mxu0
    %v1433 = vadd.f32 %v1208, %v1432
    %v1434 = vpop.f32.mrf.mxu0
    %1435 = vmatprep.mubr.f32.mxu0 0.0
    %1436 = vmatmul.mubr.f32.gmra.mxu0 %v301
    %v1437 = vpop.f32.mrf.mxu0
    %v1438 = vadd.f32 %v1213, %v1437
    %v1439 = vpop.f32.mrf.mxu0
    %1440 = vmatprep.mubr.f32.mxu0 0.0
    %1441 = vmatmul.mubr.f32.gmra.mxu0 %v303
    %v1442 = vpop.f32.mrf.mxu0
    %v1443 = vadd.f32 %v1218, %v1442
    %v1444 = vpop.f32.mrf.mxu0
    %1445 = vmatprep.mubr.f32.mxu0 0.0
    %1446 = vmatmul.mubr.f32.gmra.mxu0 %v306
    %v1447 = vpop.f32.mrf.mxu0
    %v1448 = vadd.f32 %v1223, %v1447
    %v1449 = vpop.f32.mrf.mxu0
    %1450 = vmatprep.mubr.f32.mxu0 0.0
    %1451 = vmatmul.mubr.f32.gmra.mxu0 %v308
    %v1452 = vpop.f32.mrf.mxu0
    %v1453 = vadd.f32 %v1228, %v1452
    %v1454 = vpop.f32.mrf.mxu0
    %1455 = vmatprep.mubr.f32.mxu0 0.0
    %1456 = vmatmul.mubr.f32.gmra.mxu0 %v311
    %v1457 = vpop.f32.mrf.mxu0
    %v1458 = vadd.f32 %v1233, %v1457
    %v1459 = vpop.f32.mrf.mxu0
    %1460 = vmatprep.mubr.f32.mxu0 0.0
    %1461 = vmatmul.mubr.f32.gmra.mxu0 %v313
    %v1462 = vpop.f32.mrf.mxu0
    %v1463 = vadd.f32 %v1238, %v1462
    %v1464 = vpop.f32.mrf.mxu0
    %1465 = vmatprep.mubr.f32.mxu0 0.0
    %1466 = vmatmul.mubr.f32.gmra.mxu0 %v316
    %v1467 = vpop.f32.mrf.mxu0
    %v1468 = vadd.f32 %v1243, %v1467
    %v1469 = vpop.f32.mrf.mxu0
    %1470 = vmatprep.mubr.f32.mxu0 0.0
    %1471 = vmatmul.mubr.f32.gmra.mxu0 %v318
    %v1472 = vpop.f32.mrf.mxu0
    %v1473 = vadd.f32 %v1248, %v1472
    %v1474 = vpop.f32.mrf.mxu0
    %1475 = vdwg.mxu0
    %1476 = vst [vmem:[#allocation5] sm:$0xff] %v836
    %1477 = vst [vmem:[#allocation5 + $0x8] sm:$0xff] %v838
    %1478 = vst [vmem:[#allocation5 + $0x10] sm:$0xff] %v1318
    %1479 = vst [vmem:[#allocation5 + $0x18] sm:$0xff] %v842
    %1480 = vst [vmem:[#allocation5 + $0x20] sm:$0xff] %v844
    %1481 = vst [vmem:[#allocation5 + $0x28] sm:$0xff] %v1323
    %1482 = vst [vmem:[#allocation5 + $0x30] sm:$0xff] %v848
    %1483 = vst [vmem:[#allocation5 + $0x38] sm:$0xff] %v850
    %1484 = vst [vmem:[#allocation5 + $0x40] sm:$0xff] %v1328
    %1485 = vst [vmem:[#allocation5 + $0x48] sm:$0xff] %v854
    %1486 = vst [vmem:[#allocation5 + $0x50] sm:$0xff] %v856
    %1487 = vst [vmem:[#allocation5 + $0x58] sm:$0xff] %v1333
    %1488 = vst [vmem:[#allocation5 + $0x60] sm:$0xff] %v860
    %1489 = vst [vmem:[#allocation5 + $0x68] sm:$0xff] %v862
    %1490 = vst [vmem:[#allocation5 + $0x70] sm:$0xff] %v1338
    %1491 = vst [vmem:[#allocation5 + $0x78] sm:$0xff] %v866
    %1492 = vst [vmem:[#allocation5 + $0x80] sm:$0xff] %v868
    %1493 = vst [vmem:[#allocation5 + $0x88] sm:$0xff] %v1343
    %1494 = vst [vmem:[#allocation5 + $0x90] sm:$0xff] %v872
    %1495 = vst [vmem:[#allocation5 + $0x98] sm:$0xff] %v874
    %1496 = vst [vmem:[#allocation5 + $0xa0] sm:$0xff] %v1348
    %1497 = vst [vmem:[#allocation5 + $0xa8] sm:$0xff] %v878
    %1498 = vst [vmem:[#allocation5 + $0xb0] sm:$0xff] %v880
    %1499 = vst [vmem:[#allocation5 + $0xb8] sm:$0xff] %v1353
    %1500 = vst [vmem:[#allocation5 + $0xc0] sm:$0xff] %v884
    %1501 = vst [vmem:[#allocation5 + $0xc8] sm:$0xff] %v886
    %1502 = vst [vmem:[#allocation5 + $0xd0] sm:$0xff] %v1358
    %1503 = vst [vmem:[#allocation5 + $0xd8] sm:$0xff] %v890
    %1504 = vst [vmem:[#allocation5 + $0xe0] sm:$0xff] %v892
    %1505 = vst [vmem:[#allocation5 + $0xe8] sm:$0xff] %v1363
    %1506 = vst [vmem:[#allocation5 + $0xf0] sm:$0xff] %v896
    %1507 = vst [vmem:[#allocation5 + $0xf8] sm:$0xff] %v898
    %1508 = vst [vmem:[#allocation5 + $0x100] sm:$0xff] %v1368
    %1509 = vst [vmem:[#allocation5 + $0x108] sm:$0xff] %v902
    %1510 = vst [vmem:[#allocation5 + $0x110] sm:$0xff] %v904
    %1511 = vst [vmem:[#allocation5 + $0x118] sm:$0xff] %v1373
    %1512 = vst [vmem:[#allocation5 + $0x120] sm:$0xff] %v908
    %1513 = vst [vmem:[#allocation5 + $0x128] sm:$0xff] %v910
    %1514 = vst [vmem:[#allocation5 + $0x130] sm:$0xff] %v1378
    %1515 = vst [vmem:[#allocation5 + $0x138] sm:$0xff] %v914
    %1516 = vst [vmem:[#allocation5 + $0x140] sm:$0xff] %v916
    %1517 = vst [vmem:[#allocation5 + $0x148] sm:$0xff] %v1383
    %1518 = vst [vmem:[#allocation5 + $0x150] sm:$0xff] %v920
    %1519 = vst [vmem:[#allocation5 + $0x158] sm:$0xff] %v922
    %1520 = vst [vmem:[#allocation5 + $0x160] sm:$0xff] %v1388
    %1521 = vst [vmem:[#allocation5 + $0x168] sm:$0xff] %v926
    %1522 = vst [vmem:[#allocation5 + $0x170] sm:$0xff] %v928
    %1523 = vst [vmem:[#allocation5 + $0x178] sm:$0xff] %v1393
    %1524 = vst [vmem:[#allocation5 + $0x180] sm:$0xff] %v932
    %1525 = vst [vmem:[#allocation5 + $0x188] sm:$0xff] %v934
    %1526 = vst [vmem:[#allocation5 + $0x190] sm:$0xff] %v1398
    %1527 = vst [vmem:[#allocation5 + $0x198] sm:$0xff] %v938
    %1528 = vst [vmem:[#allocation5 + $0x1a0] sm:$0xff] %v940
    %1529 = vst [vmem:[#allocation5 + $0x1a8] sm:$0xff] %v1403
    %1530 = vst [vmem:[#allocation5 + $0x1b0] sm:$0xff] %v944
    %1531 = vst [vmem:[#allocation5 + $0x1b8] sm:$0xff] %v946
    %1532 = vst [vmem:[#allocation5 + $0x1c0] sm:$0xff] %v1408
    %1533 = vst [vmem:[#allocation5 + $0x1c8] sm:$0xff] %v950
    %1534 = vst [vmem:[#allocation5 + $0x1d0] sm:$0xff] %v952
    %1535 = vst [vmem:[#allocation5 + $0x1d8] sm:$0xff] %v1413
    %1536 = vst [vmem:[#allocation5 + $0x1e0] sm:$0xff] %v956
    %1537 = vst [vmem:[#allocation5 + $0x1e8] sm:$0xff] %v958
    %1538 = vst [vmem:[#allocation5 + $0x1f0] sm:$0xff] %v1418
    %1539 = vst [vmem:[#allocation5 + $0x1f8] sm:$0xff] %v962
    %1540 = vst [vmem:[#allocation5 + $0x200] sm:$0xff] %v964
    %1541 = vst [vmem:[#allocation5 + $0x208] sm:$0xff] %v1423
    %1542 = vst [vmem:[#allocation5 + $0x210] sm:$0xff] %v968
    %1543 = vst [vmem:[#allocation5 + $0x218] sm:$0xff] %v970
    %1544 = vst [vmem:[#allocation5 + $0x220] sm:$0xff] %v1428
    %1545 = vst [vmem:[#allocation5 + $0x228] sm:$0xff] %v974
    %1546 = vst [vmem:[#allocation5 + $0x230] sm:$0xff] %v976
    %1547 = vst [vmem:[#allocation5 + $0x238] sm:$0xff] %v1433
    %1548 = vst [vmem:[#allocation5 + $0x240] sm:$0xff] %v980
    %1549 = vst [vmem:[#allocation5 + $0x248] sm:$0xff] %v982
    %1550 = vst [vmem:[#allocation5 + $0x250] sm:$0xff] %v1438
    %1551 = vst [vmem:[#allocation5 + $0x258] sm:$0xff] %v986
    %1552 = vst [vmem:[#allocation5 + $0x260] sm:$0xff] %v988
    %1553 = vst [vmem:[#allocation5 + $0x268] sm:$0xff] %v1443
    %1554 = vst [vmem:[#allocation5 + $0x270] sm:$0xff] %v992
    %1555 = vst [vmem:[#allocation5 + $0x278] sm:$0xff] %v994
    %1556 = vst [vmem:[#allocation5 + $0x280] sm:$0xff] %v1448
    %1557 = vst [vmem:[#allocation5 + $0x288] sm:$0xff] %v998
    %1558 = vst [vmem:[#allocation5 + $0x290] sm:$0xff] %v1000
    %1559 = vst [vmem:[#allocation5 + $0x298] sm:$0xff] %v1453
    %1560 = vst [vmem:[#allocation5 + $0x2a0] sm:$0xff] %v1004
    %1561 = vst [vmem:[#allocation5 + $0x2a8] sm:$0xff] %v1006
    %1562 = vst [vmem:[#allocation5 + $0x2b0] sm:$0xff] %v1458
    %1563 = vst [vmem:[#allocation5 + $0x2b8] sm:$0xff] %v1010
    %1564 = vst [vmem:[#allocation5 + $0x2c0] sm:$0xff] %v1012
    %1565 = vst [vmem:[#allocation5 + $0x2c8] sm:$0xff] %v1463
    %1566 = vst [vmem:[#allocation5 + $0x2d0] sm:$0xff] %v1016
    %1567 = vst [vmem:[#allocation5 + $0x2d8] sm:$0xff] %v1018
    %1568 = vst [vmem:[#allocation5 + $0x2e0] sm:$0xff] %v1468
    %1569 = vst [vmem:[#allocation5 + $0x2e8] sm:$0xff] %v1022
    %1570 = vst [vmem:[#allocation5 + $0x2f0] sm:$0xff] %v1024
    %1571 = vst [vmem:[#allocation5 + $0x2f8] sm:$0xff] %v1473
    // Predicated region
    $region18: #{tpu_custom_call.1} parent=1 // pred_check
      _
    $region19: #{tpu_custom_call.1} parent=1 // pred_check_branch
      %1573 = sbr.rel (0) target = $region21
    $region20: #{tpu_custom_call.1} parent=1 // pred_region
      %s1575 = ssub.s32 12288, 12288
      %1576 = vsyncadd [#allocation4], %s1575
      %s1577 = sshll.u32 [#allocation5], 4
      %s1578 = int_to_ptr.vmem [resolvable:$true] %s1577
      %1583 = dma.vmem_to_hbm [thread:$0]  %s1578, 12288, %s3, [#allocation4], 384, 384, 24
    $region21: #{tpu_custom_call.1} parent=1 // pred_fallthru
      _
    // Predicated region
    $region22: #{tpu_custom_call.1} parent=1 // pred_check
      _
    $region23: #{tpu_custom_call.1} parent=1 // pred_check_branch
      %1585 = sbr.rel (0) target = $region25
    $region24: #{tpu_custom_call.1} parent=1 // pred_region
      %1586 = dma.done [#allocation4], 12288
    $region25: #{tpu_custom_call.1} parent=1 // pred_fallthru
      _
    %1587 = vsyncpa [#allocation3], 1
    %1588 = vsyncpa [#allocation4], 1

</llo_original>
